<compile_context>
chip_gen: v6e
topology: v6e:2x2x1
jax: 0.10.0
libtpu: 0.0.40
codegen_flags: <defaults>
</compile_context>

<pallas_src>
import jax
import jax.numpy as jnp
import numpy as np
from jax import lax
from jax.experimental import pallas as pl
from jax.experimental.pallas import tpu as pltpu


# ----------------------------------------------------------------------------
# Fused CoAttention kernel (one batch element per grid step, all in VMEM)
# ----------------------------------------------------------------------------

def coattention_kernel(c_ref, q_ref, cmask_ref, qmask_ref, out_ref):
    P = lax.Precision.HIGHEST
    c = c_ref[...]                      # (Lc, D)
    q = q_ref[...]                      # (Lq, D)
    cm = cmask_ref[...]                 # (Lc, 1)  float 0/1
    qm = qmask_ref[...]                 # (1, Lq)  float 0/1

    # Similarity S = c @ q^T, expressed via contraction dims (no explicit transpose).
    S = lax.dot_general(c, q, (((1,), (1,)), ((), ())),
                        precision=P, preferred_element_type=jnp.float32)   # (Lc, Lq)

    neg = jnp.float32(-1e30)

    # ac: masked softmax over the q axis (lanes), masked by q_mask.
    s_q = jnp.where(qm > 0.0, S, neg)
    s_q = s_q - jnp.max(s_q, axis=1, keepdims=True)
    e_q = jnp.exp(s_q)
    ac = e_q / jnp.sum(e_q, axis=1, keepdims=True)                         # (Lc, Lq)

    # aq: masked softmax over the c axis (sublanes), masked by c_mask.
    s_c = jnp.where(cm > 0.0, S, neg)
    s_c = s_c - jnp.max(s_c, axis=0, keepdims=True)
    e_c = jnp.exp(s_c)
    aq = e_c / jnp.sum(e_c, axis=0, keepdims=True)                         # (Lc, Lq)

    # Cq^T = aq^T @ c  (contract the c axis of both; avoids materializing aq^T).
    CqT = lax.dot_general(aq, c, (((0,), (0,)), ((), ())),
                          precision=P, preferred_element_type=jnp.float32)  # (Lq, D)

    # Cc^T = ac @ [q ; Cq^T]  computed as two matmuls (the two halves of Cc^T).
    a2q = jnp.dot(ac, q, precision=P, preferred_element_type=jnp.float32)   # (Lc, D)
    a2c = jnp.dot(ac, CqT, precision=P, preferred_element_type=jnp.float32) # (Lc, D)

    # out = [c , Cc^T] — single lane-dense full-block store.
    out_ref[...] = jnp.concatenate([c, a2q, a2c], axis=-1)                  # (Lc, 3D)


# ----------------------------------------------------------------------------
# Wrapper
# ----------------------------------------------------------------------------

def coattention_forward(c, q, c_mask, q_mask):
    """c: (B, Lc, D), q: (B, Lq, D), c_mask: (B, Lc) bool, q_mask: (B, Lq) bool.
    Returns (B, Lc, 3D) = CoAttention.forward output."""
    B, Lc, D = c.shape
    Lq = q.shape[1]
    cm = c_mask.astype(jnp.float32)[:, :, None]     # (B, Lc, 1)
    qm = q_mask.astype(jnp.float32)[:, None, :]     # (B, 1, Lq)

    return pl.pallas_call(
        coattention_kernel,
        grid=(B,),
        in_specs=[
            pl.BlockSpec((None, Lc, D), lambda b: (b, 0, 0)),
            pl.BlockSpec((None, Lq, D), lambda b: (b, 0, 0)),
            pl.BlockSpec((None, Lc, 1), lambda b: (b, 0, 0)),
            pl.BlockSpec((None, 1, Lq), lambda b: (b, 0, 0)),
        ],
        out_specs=pl.BlockSpec((None, Lc, 3 * D), lambda b: (b, 0, 0)),
        out_shape=jax.ShapeDtypeStruct((B, Lc, 3 * D), jnp.float32),
        compiler_params=pltpu.CompilerParams(dimension_semantics=("parallel",)),
    )(c, q, cm, qm)


# ----------------------------------------------------------------------------
# Pure-JAX reference (mirrors the PyTorch module exactly)
# ----------------------------------------------------------------------------

def ref_forward(c, q, c_mask, q_mask):
    P = lax.Precision.HIGHEST
    cm = c_mask.astype(jnp.float32)[:, :, None]     # (B, Lc, 1)
    qm = q_mask.astype(jnp.float32)[:, None, :]     # (B, 1, Lq)

    S = jnp.einsum("bcd,bqd->bcq", c, q, precision=P)                       # (B, Lc, Lq)
    ac = jax.nn.softmax(qm * S + (1.0 - qm) * (-1e30), axis=2)              # (B, Lc, Lq)
    aq = jax.nn.softmax(cm * S + (1.0 - cm) * (-1e30), axis=1)              # (B, Lc, Lq)

    Cq = jnp.einsum("bcd,bcq->bdq", c, aq, precision=P)                     # (B, D, Lq)
    concatenated = jnp.concatenate([jnp.swapaxes(q, 1, 2), Cq], axis=1)     # (B, 2D, Lq)
    Cc = jnp.einsum("bdq,bcq->bdc", concatenated, ac, precision=P)          # (B, 2D, Lc)
    out = jnp.concatenate([c, jnp.swapaxes(Cc, 1, 2)], axis=2)              # (B, Lc, 3D)
    return out


# ----------------------------------------------------------------------------
# Main
# ----------------------------------------------------------------------------

if __name__ == "__main__":
    B, Lc, Lq, D = 2, 16, 8, 64

    key = jax.random.PRNGKey(0)
    kc, kq = jax.random.split(key, 2)
    c = jax.random.normal(kc, (B, Lc, D), jnp.float32)
    q = jax.random.normal(kq, (B, Lq, D), jnp.float32)

    # Length (prefix) masks, as produced by BiDAF padding.
    c_lens = jnp.array([Lc, Lc - 5], jnp.int32)
    q_lens = jnp.array([Lq, Lq - 3], jnp.int32)
    c_mask = jnp.arange(Lc)[None, :] < c_lens[:, None]   # (B, Lc) bool
    q_mask = jnp.arange(Lq)[None, :] < q_lens[:, None]   # (B, Lq) bool

    out = coattention_forward(c, q, c_mask, q_mask)
    jax.block_until_ready(out)

    ref = ref_forward(c, q, c_mask, q_mask)
    np.testing.assert_allclose(np.asarray(out), np.asarray(ref), rtol=1e-3, atol=1e-3)

    print("KERNEL_OK")
</pallas_src>

<mosaic_0001>
module attributes {stable_mosaic.version = 11 : i64} {
  func.func @coattention_kernel(%arg0: i32, %arg1: memref<1x16x64xf32, #tpu.memory_space<vmem>>, %arg2: memref<1x8x64xf32, #tpu.memory_space<vmem>>, %arg3: memref<1x16x1xf32, #tpu.memory_space<vmem>>, %arg4: memref<1x1x8xf32, #tpu.memory_space<vmem>>, %arg5: memref<1x16x192xf32, #tpu.memory_space<vmem>>) attributes {dimension_semantics = [#tpu.dimension_semantics<parallel>], iteration_bounds = array<i64: 2>, scalar_prefetch = 0 : i64, scratch_operands = 0 : i64, tpu.core_type = #tpu.core_type<tc>, window_params = [{transform_indices = @transform_0, window_bounds = array<i64: 1, 16, 64>}, {transform_indices = @transform_1, window_bounds = array<i64: 1, 8, 64>}, {transform_indices = @transform_2, window_bounds = array<i64: 1, 16, 1>}, {transform_indices = @transform_3, window_bounds = array<i64: 1, 1, 8>}, {transform_indices = @transform_4, window_bounds = array<i64: 1, 16, 192>}]} {
    %c0 = arith.constant 0 : index
    %c0_0 = arith.constant 0 : index
    %c0_1 = arith.constant 0 : index
    %0 = vector.load %arg1[%c0, %c0_0, %c0_1] : memref<1x16x64xf32, #tpu.memory_space<vmem>>, vector<1x16x64xf32>
    %1 = vector.shape_cast %0 : vector<1x16x64xf32> to vector<16x64xf32>
    %c0_2 = arith.constant 0 : index
    %c0_3 = arith.constant 0 : index
    %c0_4 = arith.constant 0 : index
    %2 = vector.load %arg2[%c0_2, %c0_3, %c0_4] : memref<1x8x64xf32, #tpu.memory_space<vmem>>, vector<1x8x64xf32>
    %3 = vector.shape_cast %2 : vector<1x8x64xf32> to vector<8x64xf32>
    %c0_5 = arith.constant 0 : index
    %c0_6 = arith.constant 0 : index
    %c0_7 = arith.constant 0 : index
    %4 = vector.load %arg3[%c0_5, %c0_6, %c0_7] : memref<1x16x1xf32, #tpu.memory_space<vmem>>, vector<1x16x1xf32>
    %5 = vector.shape_cast %4 : vector<1x16x1xf32> to vector<16x1xf32>
    %c0_8 = arith.constant 0 : index
    %c0_9 = arith.constant 0 : index
    %c0_10 = arith.constant 0 : index
    %6 = vector.load %arg4[%c0_8, %c0_9, %c0_10] : memref<1x1x8xf32, #tpu.memory_space<vmem>>, vector<1x1x8xf32>
    %7 = vector.shape_cast %6 : vector<1x1x8xf32> to vector<1x8xf32>
    %cst = arith.constant dense<0.000000e+00> : vector<16x8xf32>
    %8 = tpu.matmul %1, %3, %cst {dimension_numbers = #tpu.dot_dimension_numbers<[1], [1], [0], [0], [0, 0, 1, 0], [], []>, precision = #tpu.contract_precision<fp32>} : vector<16x64xf32>, vector<8x64xf32>, vector<16x8xf32> -> vector<16x8xf32>
    %cst_11 = arith.constant 0.000000e+00 : f32
    %9 = vector.broadcast %cst_11 : f32 to vector<1x8xf32>
    %10 = arith.cmpf ogt, %7, %9 : vector<1x8xf32>
    %cst_12 = arith.constant -1.000000e+30 : f32
    %11 = vector.shape_cast %10 : vector<1x8xi1> to vector<1x8xi1>
    %12 = vector.broadcast %11 : vector<1x8xi1> to vector<16x8xi1>
    %13 = vector.broadcast %cst_12 : f32 to vector<16x8xf32>
    %14 = arith.select %12, %8, %13 : vector<16x8xi1>, vector<16x8xf32>
    %cst_13 = arith.constant dense<0xFF800000> : vector<16xf32>
    %15 = vector.multi_reduction <maximumf>, %14, %cst_13 [1] : vector<16x8xf32> to vector<16xf32>
    %16 = vector.shape_cast %15 : vector<16xf32> to vector<16x1xf32>
    %17 = vector.broadcast %16 : vector<16x1xf32> to vector<16x8xf32>
    %18 = arith.subf %14, %17 : vector<16x8xf32>
    %19 = math.exp %18 : vector<16x8xf32>
    %cst_14 = arith.constant dense<0.000000e+00> : vector<16xf32>
    %20 = vector.multi_reduction <add>, %19, %cst_14 [1] : vector<16x8xf32> to vector<16xf32>
    %21 = vector.shape_cast %20 : vector<16xf32> to vector<16x1xf32>
    %22 = vector.broadcast %21 : vector<16x1xf32> to vector<16x8xf32>
    %23 = arith.divf %19, %22 : vector<16x8xf32>
    %cst_15 = arith.constant 0.000000e+00 : f32
    %24 = vector.broadcast %cst_15 : f32 to vector<16x1xf32>
    %25 = arith.cmpf ogt, %5, %24 : vector<16x1xf32>
    %cst_16 = arith.constant -1.000000e+30 : f32
    %26 = vector.shape_cast %25 : vector<16x1xi1> to vector<16x1xi1>
    %27 = vector.broadcast %26 : vector<16x1xi1> to vector<16x8xi1>
    %28 = vector.broadcast %cst_16 : f32 to vector<16x8xf32>
    %29 = arith.select %27, %8, %28 : vector<16x8xi1>, vector<16x8xf32>
    %cst_17 = arith.constant dense<0xFF800000> : vector<8xf32>
    %30 = vector.multi_reduction <maximumf>, %29, %cst_17 [0] : vector<16x8xf32> to vector<8xf32>
    %31 = vector.shape_cast %30 : vector<8xf32> to vector<1x8xf32>
    %32 = vector.broadcast %31 : vector<1x8xf32> to vector<16x8xf32>
    %33 = arith.subf %29, %32 : vector<16x8xf32>
    %34 = math.exp %33 : vector<16x8xf32>
    %cst_18 = arith.constant dense<0.000000e+00> : vector<8xf32>
    %35 = vector.multi_reduction <add>, %34, %cst_18 [0] : vector<16x8xf32> to vector<8xf32>
    %36 = vector.shape_cast %35 : vector<8xf32> to vector<1x8xf32>
    %37 = vector.broadcast %36 : vector<1x8xf32> to vector<16x8xf32>
    %38 = arith.divf %34, %37 : vector<16x8xf32>
    %cst_19 = arith.constant dense<0.000000e+00> : vector<8x64xf32>
    %39 = tpu.matmul %38, %1, %cst_19 {dimension_numbers = #tpu.dot_dimension_numbers<[0], [0], [1], [1], [0, 1, 1, 1], [], []>, precision = #tpu.contract_precision<fp32>} : vector<16x8xf32>, vector<16x64xf32>, vector<8x64xf32> -> vector<8x64xf32>
    %cst_20 = arith.constant dense<0.000000e+00> : vector<16x64xf32>
    %40 = tpu.matmul %23, %3, %cst_20 {dimension_numbers = #tpu.dot_dimension_numbers<[1], [0], [0], [1], [0, 0, 1, 1], [], []>, precision = #tpu.contract_precision<fp32>} : vector<16x8xf32>, vector<8x64xf32>, vector<16x64xf32> -> vector<16x64xf32>
    %cst_21 = arith.constant dense<0.000000e+00> : vector<16x64xf32>
    %41 = tpu.matmul %23, %39, %cst_21 {dimension_numbers = #tpu.dot_dimension_numbers<[1], [0], [0], [1], [0, 0, 1, 1], [], []>, precision = #tpu.contract_precision<fp32>} : vector<16x8xf32>, vector<8x64xf32>, vector<16x64xf32> -> vector<16x64xf32>
    %42 = tpu.concatenate %1, %40, %41 in 1 : vector<16x64xf32>, vector<16x64xf32>, vector<16x64xf32> -> vector<16x192xf32>
    %c0_22 = arith.constant 0 : index
    %c0_23 = arith.constant 0 : index
    %c0_24 = arith.constant 0 : index
    %43 = vector.load %arg5[%c0_22, %c0_23, %c0_24] : memref<1x16x192xf32, #tpu.memory_space<vmem>>, vector<1x16x192xf32>
    %44 = vector.shape_cast %43 : vector<1x16x192xf32> to vector<16x192xf32>
    %45 = vector.shape_cast %42 : vector<16x192xf32> to vector<1x16x192xf32>
    tpu.vector_store %arg5[%c0_22, %c0_23, %c0_24], %45 {strides = array<i32>} : memref<1x16x192xf32, #tpu.memory_space<vmem>>, vector<1x16x192xf32>,
    return
  }
  func.func @transform_0(%arg0: i32) -> (i32, i32, i32) {
    %c0_i32 = arith.constant 0 : i32
    %c0_i32_0 = arith.constant 0 : i32
    %c0_i32_1 = arith.constant 0 : i32
    return %arg0, %c0_i32, %c0_i32_0 : i32, i32, i32
  }
  func.func @transform_1(%arg0: i32) -> (i32, i32, i32) {
    %c0_i32 = arith.constant 0 : i32
    %c0_i32_0 = arith.constant 0 : i32
    %c0_i32_1 = arith.constant 0 : i32
    return %arg0, %c0_i32, %c0_i32_0 : i32, i32, i32
  }
  func.func @transform_2(%arg0: i32) -> (i32, i32, i32) {
    %c0_i32 = arith.constant 0 : i32
    %c0_i32_0 = arith.constant 0 : i32
    %c0_i32_1 = arith.constant 0 : i32
    return %arg0, %c0_i32, %c0_i32_0 : i32, i32, i32
  }
  func.func @transform_3(%arg0: i32) -> (i32, i32, i32) {
    %c0_i32 = arith.constant 0 : i32
    %c0_i32_0 = arith.constant 0 : i32
    %c0_i32_1 = arith.constant 0 : i32
    return %arg0, %c0_i32, %c0_i32_0 : i32, i32, i32
  }
  func.func @transform_4(%arg0: i32) -> (i32, i32, i32) {
    %c0_i32 = arith.constant 0 : i32
    %c0_i32_0 = arith.constant 0 : i32
    %c0_i32_1 = arith.constant 0 : i32
    return %arg0, %c0_i32, %c0_i32_0 : i32, i32, i32
  }
}

</mosaic_0001>

<llo_original>
// kernel: tpu_custom_call.1
$region0: #{tpu_custom_call.1}
  #allocation0 [shape = 'u32[]', space=smem, size = 0x4, offset = 0x4, fixed_abs, tag = 'smem constant byte address 0x4 - core index']
  #allocation1 [shape = 'u32[144,128]{1,0:T(1,128)}', space=vmem, size = 0x12000, scoped, tag = 'internal scratch']
  %s0 = inlined_call_operand.vmem [shape: f32[2,16,64], index: 0, kind: input, shape index: {}]
  %s1 = inlined_call_operand.hbm [shape: f32[2,8,64], index: 1, kind: input, shape index: {}]
  %s2 = inlined_call_operand.vmem [shape: f32[2,16,1], index: 2, kind: input, shape index: {}]
  %s3 = inlined_call_operand.vmem [shape: f32[2,1,8], index: 3, kind: input, shape index: {}]
  %s4 = inlined_call_operand.hbm [shape: f32[2,16,192], index: 4, kind: output, shape index: {}]
  %s5 = sld [smem:[#allocation0]]
  $region53: #{tpu_custom_call.1} parent=0
    _
  %s7 = ssub.s32 1, %s5
  %s8 = scalar_select 0, %s7, %s5
  $region1: #{tpu_custom_call.1} parent=0
    #allocation2 [shape = 'u8[8192]{0}', space=vmem, size = 0x2000, scoped, tag = 'input window, operand 1']
    #allocation3 [shape = 's32[2]{0}', space=sflag, size = 0x8, scoped, tag = 'scoped memory for tpu_custom_call.1']
    #allocation4 [shape = 's32[2]{0}', space=sflag, size = 0x8, scoped, tag = 'scoped memory for tpu_custom_call.1']
    #allocation5 [shape = 'u8[32768]{0}', space=vmem, size = 0x8000, scoped, tag = 'output window, operand 0']
    %9 = vsyncpa [#allocation3], 0
    %s10 = scalar_lea.sflag [#allocation3], 1
    %11 = vsyncpa %s10, 0
    %12 = vsyncpa [#allocation4], 0
    %s13 = scalar_lea.sflag [#allocation4], 1
    %14 = vsyncpa %s13, 0
    loop: start=0, step=1, limit=4
    $region2: #{tpu_custom_call.1} parent=1 // loop_pre_header
      _
    $region3: #{tpu_custom_call.1} parent=1 // loop_header
      %s16 = sphi 0, %s20
      %p17 = scmp.ge.s32.totalorder %s16, 4
      %s26 = sphi 0, %s28
      %s29 = sphi 0, %s26
      %s30 = sphi 0, %s29
      %s46 = sphi 0, %s30
      %s52 = sphi 0, %s54
      %s55 = sphi 0, %s52
      %s56 = sphi 0, %s55
      %s72 = sphi 0, %s56
      %s78 = sphi 0, %s80
      %s81 = sphi 0, %s78
      %s82 = sphi 0, %s81
      %s98 = sphi 0, %s82
      %s104 = sphi 0, %s106
      %s107 = sphi 0, %s104
      %s108 = sphi 0, %s107
      %s124 = sphi 0, %s108
      %s130 = sphi 0, %s132
      %s133 = sphi 0, %s130
      %s134 = sphi 0, %s133
      %s150 = sphi 0, %s134
    $region4: #{tpu_custom_call.1} parent=1 // loop_header_branch
      %19 = sbr.rel (%p17) target = $region8
    $region5: #{tpu_custom_call.1} parent=1 // loop_body
      %s21 = ssub.s32 %s16, 1
      %s22 = ssub.s32 %s16, 2
      %s23 = sadd.s32 %s16, 1
      %s24 = ssub.s32 %s16, %s23
      %p25 = scmp.eq.s32.totalorder %s24, 0
      %s27 = sadd.s32 %s26, 1
      %s28 = scalar_select %p25, %s26, %s27
      %p31 = pneg %p25
      %p32 = scmp.eq.s32.totalorder %s16, 1
      %p33 = por %p31, %p32
      %p34 = scmp.ne.s32.totalorder %s26, %s29
      %p35 = scmp.eq.s32.totalorder %s16, 0
      %p36 = por %p34, %p35
      %p37 = scmp.ne.s32.totalorder %s26, %s29
      %p38 = scmp.eq.s32.totalorder %s21, 1
      %p39 = por %p37, %p38
      %p40 = scmp.ne.s32.totalorder %s29, %s30
      %p41 = scmp.eq.s32.totalorder %s21, 0
      %p42 = por %p40, %p41
      %p43 = scmp.ne.s32.totalorder %s29, %s30
      %p44 = scmp.eq.s32.totalorder %s22, 1
      %p45 = por %p43, %p44
      %p47 = scmp.ne.s32.totalorder %s30, %s46
      %p48 = scmp.eq.s32.totalorder %s22, 0
      %p49 = por %p47, %p48
      %s50 = ssub.s32 %s16, %s23
      %p51 = scmp.eq.s32.totalorder %s50, 0
      %s53 = sadd.s32 %s52, 1
      %s54 = scalar_select %p51, %s52, %s53
      %p57 = pneg %p51
      %p58 = scmp.eq.s32.totalorder %s16, 1
      %p59 = por %p57, %p58
      %p60 = scmp.ne.s32.totalorder %s52, %s55
      %p61 = scmp.eq.s32.totalorder %s16, 0
      %p62 = por %p60, %p61
      %p63 = scmp.ne.s32.totalorder %s52, %s55
      %p64 = scmp.eq.s32.totalorder %s21, 1
      %p65 = por %p63, %p64
      %p66 = scmp.ne.s32.totalorder %s55, %s56
      %p67 = scmp.eq.s32.totalorder %s21, 0
      %p68 = por %p66, %p67
      %p69 = scmp.ne.s32.totalorder %s55, %s56
      %p70 = scmp.eq.s32.totalorder %s22, 1
      %p71 = por %p69, %p70
      %p73 = scmp.ne.s32.totalorder %s56, %s72
      %p74 = scmp.eq.s32.totalorder %s22, 0
      %p75 = por %p73, %p74
      %s76 = ssub.s32 %s16, %s23
      %p77 = scmp.eq.s32.totalorder %s76, 0
      %s79 = sadd.s32 %s78, 1
      %s80 = scalar_select %p77, %s78, %s79
      %p83 = pneg %p77
      %p84 = scmp.eq.s32.totalorder %s16, 1
      %p85 = por %p83, %p84
      %p86 = scmp.ne.s32.totalorder %s78, %s81
      %p87 = scmp.eq.s32.totalorder %s16, 0
      %p88 = por %p86, %p87
      %p89 = scmp.ne.s32.totalorder %s78, %s81
      %p90 = scmp.eq.s32.totalorder %s21, 1
      %p91 = por %p89, %p90
      %p92 = scmp.ne.s32.totalorder %s81, %s82
      %p93 = scmp.eq.s32.totalorder %s21, 0
      %p94 = por %p92, %p93
      %p95 = scmp.ne.s32.totalorder %s81, %s82
      %p96 = scmp.eq.s32.totalorder %s22, 1
      %p97 = por %p95, %p96
      %p99 = scmp.ne.s32.totalorder %s82, %s98
      %p100 = scmp.eq.s32.totalorder %s22, 0
      %p101 = por %p99, %p100
      %s102 = ssub.s32 %s16, %s23
      %p103 = scmp.eq.s32.totalorder %s102, 0
      %s105 = sadd.s32 %s104, 1
      %s106 = scalar_select %p103, %s104, %s105
      %p109 = pneg %p103
      %p110 = scmp.eq.s32.totalorder %s16, 1
      %p111 = por %p109, %p110
      %p112 = scmp.ne.s32.totalorder %s104, %s107
      %p113 = scmp.eq.s32.totalorder %s16, 0
      %p114 = por %p112, %p113
      %p115 = scmp.ne.s32.totalorder %s104, %s107
      %p116 = scmp.eq.s32.totalorder %s21, 1
      %p117 = por %p115, %p116
      %p118 = scmp.ne.s32.totalorder %s107, %s108
      %p119 = scmp.eq.s32.totalorder %s21, 0
      %p120 = por %p118, %p119
      %p121 = scmp.ne.s32.totalorder %s107, %s108
      %p122 = scmp.eq.s32.totalorder %s22, 1
      %p123 = por %p121, %p122
      %p125 = scmp.ne.s32.totalorder %s108, %s124
      %p126 = scmp.eq.s32.totalorder %s22, 0
      %p127 = por %p125, %p126
      %s128 = ssub.s32 %s16, %s23
      %p129 = scmp.eq.s32.totalorder %s128, 0
      %s131 = sadd.s32 %s130, 1
      %s132 = scalar_select %p129, %s130, %s131
      %p135 = pneg %p129
      %p136 = scmp.eq.s32.totalorder %s16, 1
      %p137 = por %p135, %p136
      %p138 = scmp.ne.s32.totalorder %s130, %s133
      %p139 = scmp.eq.s32.totalorder %s16, 0
      %p140 = por %p138, %p139
      %p141 = scmp.ne.s32.totalorder %s130, %s133
      %p142 = scmp.eq.s32.totalorder %s21, 1
      %p143 = por %p141, %p142
      %p144 = scmp.ne.s32.totalorder %s133, %s134
      %p145 = scmp.eq.s32.totalorder %s21, 0
      %p146 = por %p144, %p145
      %p147 = scmp.ne.s32.totalorder %s133, %s134
      %p148 = scmp.eq.s32.totalorder %s22, 1
      %p149 = por %p147, %p148
      %p151 = scmp.ne.s32.totalorder %s134, %s150
      %p152 = scmp.eq.s32.totalorder %s22, 0
      %p153 = por %p151, %p152
      %p154 = scmp.le.s32.totalorder 1, %s16
      %p155 = scmp.lt.s32.totalorder %s16, 3
      %p156 = pnand %p154, %p155
      %p157 = pneg %p156
      // Predicated region
      $region9: #{tpu_custom_call.1} parent=5 // pred_check
        _
      $region10: #{tpu_custom_call.1} parent=5 // pred_check_branch
        %159 = sbr.rel (%p156) target = $region12
      $region11: #{tpu_custom_call.1} parent=5 // pred_region
        %s160 = ssub.s32 %s16, 1
      $region12: #{tpu_custom_call.1} parent=5 // pred_fallthru
        _
      %p161 = scmp.lt.s32.totalorder %s16, 2
      // Predicated region
      $region13: #{tpu_custom_call.1} parent=5 // pred_check
        %p162 = pneg %p161
      $region14: #{tpu_custom_call.1} parent=5 // pred_check_branch
        %164 = sbr.rel (%p162) target = $region16
      $region15: #{tpu_custom_call.1} parent=5 // pred_region
        // Predicated region
        $region17: #{tpu_custom_call.1} parent=15 // pred_check
          %p165 = pneg %p36
        $region18: #{tpu_custom_call.1} parent=15 // pred_check_branch
          %167 = sbr.rel (%p165) target = $region20
        $region19: #{tpu_custom_call.1} parent=15 // pred_region
          %p168 = scmp.lt.s32.totalorder %s16, 1
          %s169 = scalar_select %p168, %s16, 1
          %s170 = smul.addr %s169, 2
          %s171 = smul.addr %s170, 8
          %s172 = scalar_lea.vmem %s0, %s171
        $region20: #{tpu_custom_call.1} parent=15 // pred_fallthru
          _
        // Predicated region
        $region21: #{tpu_custom_call.1} parent=15 // pred_check
          %p173 = pneg %p62
        $region22: #{tpu_custom_call.1} parent=15 // pred_check_branch
          %175 = sbr.rel (%p173) target = $region24
        $region23: #{tpu_custom_call.1} parent=15 // pred_region
          %s176 = sand.u32 %s52, 1
          %s177 = scalar_lea.sflag [#allocation3], %s176
          %s178 = sand.u32 %s52, 1
          %s179 = smul.addr %s178, 8
          %s180 = scalar_lea.vmem [#allocation2], %s179
          %s182 = ssub.s32 128, 128
          %183 = vsyncadd %s177, %s182
          %s184 = smul.addr %s16, 128
          %s185 = scalar_lea.hbm %s1, %s184
          %s187 = sshll.u32 %s180, 4
          %s188 = int_to_ptr.vmem [resolvable:$true] %s187
          %190 = dma.hbm_to_vmem [thread:$0]  %s185, 128, %s188, %s177
        $region24: #{tpu_custom_call.1} parent=15 // pred_fallthru
          _
        // Predicated region
        $region25: #{tpu_custom_call.1} parent=15 // pred_check
          %p191 = pneg %p88
        $region26: #{tpu_custom_call.1} parent=15 // pred_check_branch
          %193 = sbr.rel (%p191) target = $region28
        $region27: #{tpu_custom_call.1} parent=15 // pred_region
          %p194 = scmp.lt.s32.totalorder %s16, 1
          %s195 = scalar_select %p194, %s16, 1
          %s196 = smul.addr %s195, 2
          %s197 = smul.addr %s196, 8
          %s198 = scalar_lea.vmem %s2, %s197
        $region28: #{tpu_custom_call.1} parent=15 // pred_fallthru
          _
        // Predicated region
        $region29: #{tpu_custom_call.1} parent=15 // pred_check
          %p199 = pneg %p114
        $region30: #{tpu_custom_call.1} parent=15 // pred_check_branch
          %201 = sbr.rel (%p199) target = $region32
        $region31: #{tpu_custom_call.1} parent=15 // pred_region
          %p202 = scmp.lt.s32.totalorder %s16, 1
          %s203 = scalar_select %p202, %s16, 1
          %s204 = scalar_lea.vmem %s3, %s203
        $region32: #{tpu_custom_call.1} parent=15 // pred_fallthru
          _
      $region16: #{tpu_custom_call.1} parent=5 // pred_fallthru
        _
      %p205 = scmp.le.s32.totalorder 1, %s16
      %p206 = scmp.lt.s32.totalorder %s16, 3
      %p207 = pnand %p205, %p206
      %p208 = pneg %p207
      // Predicated region
      $region33: #{tpu_custom_call.1} parent=5 // pred_check
        _
      $region34: #{tpu_custom_call.1} parent=5 // pred_check_branch
        %210 = sbr.rel (%p207) target = $region36
      $region35: #{tpu_custom_call.1} parent=5 // pred_region
        %s211 = ssub.s32 %s16, 1
        %s212 = sand.u32 %s55, 1
        %s213 = scalar_lea.sflag [#allocation3], %s212
        %s214 = sand.u32 %s55, 1
        %s215 = smul.addr %s214, 8
        %s216 = scalar_lea.vmem [#allocation2], %s215
        // Predicated region
        $region37: #{tpu_custom_call.1} parent=35 // pred_check
          %p217 = pneg %p68
        $region38: #{tpu_custom_call.1} parent=35 // pred_check_branch
          %219 = sbr.rel (%p217) target = $region40
        $region39: #{tpu_custom_call.1} parent=35 // pred_region
          %220 = dma.done %s213, 128
        $region40: #{tpu_custom_call.1} parent=35 // pred_fallthru
          _
        %p221 = scmp.lt.s32.totalorder %s21, 1
        %s222 = scalar_select %p221, %s21, 1
        %s223 = smul.addr %s222, 2
        %s224 = smul.addr %s223, 8
        %s225 = scalar_lea.vmem %s0, %s224
        %p226 = pneg %p42
        %p227 = pneg %p39
        %s228 = sand.u32 %s55, 1
        %s229 = scalar_lea.sflag [#allocation3], %s228
        %s230 = sand.u32 %s55, 1
        %s231 = smul.addr %s230, 8
        %s232 = scalar_lea.vmem [#allocation2], %s231
        %p233 = pneg %p68
        %p234 = pneg %p65
        %p235 = scmp.lt.s32.totalorder %s21, 1
        %s236 = scalar_select %p235, %s21, 1
        %s237 = smul.addr %s236, 2
        %s238 = smul.addr %s237, 8
        %s239 = scalar_lea.vmem %s2, %s238
        %p240 = pneg %p94
        %p241 = pneg %p91
        %p242 = scmp.lt.s32.totalorder %s21, 1
        %s243 = scalar_select %p242, %s21, 1
        %s244 = scalar_lea.vmem %s3, %s243
        %p245 = pneg %p120
        %p246 = pneg %p117
        %p247 = pneg %p146
        %p248 = pneg %p143
        %s249 = sand.u32 %s133, 1
        %s250 = scalar_lea.sflag [#allocation4], %s249
        %s251 = sand.u32 %s133, 1
        %s252 = smul.addr %s251, 32
        %s253 = scalar_lea.vmem [#allocation5], %s252
        %p254 = scmp.lt.s32.totalorder %s21, 1
        %s255 = scalar_select %p254, %s21, 1
        %s256 = smul.addr %s255, 2
        %s257 = smul.addr %s256, 8
        %s258 = scalar_lea.vmem %s0, %s257
        %p259 = scmp.lt.s32.totalorder %s21, 1
        %s260 = scalar_select %p259, %s21, 1
        %s261 = smul.addr %s260, 2
        %s262 = smul.addr %s261, 8
        %s263 = scalar_lea.vmem %s2, %s262
        %p264 = scmp.lt.s32.totalorder %s21, 1
        %s265 = scalar_select %p264, %s21, 1
        %s266 = scalar_lea.vmem %s3, %s265
        %v267 = vld [vmem:[%s258] sm:$0xff]
        %v268 = vld [vmem:[%s258 + $0x8] sm:$0xff]
        %v269 = vld [vmem:[%s216] sm:$0xff]
        %v270 = vld [vmem:[%s263] sm:$0xff]
        %v271 = vld [vmem:[%s263 + $0x8] sm:$0xff]
        %v272 = vld [vmem:[%s266] sm:$0x1]
        %vm273 = vcmask 523264
        %v275 = vsel %vm273, %v267, 0
        %v278 = vsel %vm273, %v268, 0
        %v281 = vsel %vm273, %v269, 0
        %283 = vmatprep.subr.mxu0 0.0
        %284 = vmatpush1.xpose.msra.mxu0 0.0
        %285 = vmatprep.subr.mxu0 0.0
        %286 = vmatpush1.xpose.msra.mxu0 0.0
        %287 = vmatprep.subr.mxu0 0.0
        %288 = vmatpush1.xpose.msra.mxu0 0.0
        %289 = vmatprep.subr.mxu0 0.0
        %290 = vmatpush1.xpose.msra.mxu0 0.0
        %291 = vmatprep.subr.mxu0 0.0
        %292 = vmatpush1.xpose.msra.mxu0 0.0
        %293 = vmatprep.subr.mxu0 0.0
        %294 = vmatpush1.xpose.msra.mxu0 0.0
        %295 = vmatprep.subr.mxu0 0.0
        %296 = vmatpush1.xpose.msra.mxu0 0.0
        %297 = vmatprep.subr.mxu0 0.0
        %298 = vmatpush1.xpose.msra.mxu0 0.0
        %299 = vmatprep.subr.mxu0 0.0
        %300 = vmatpush1.xpose.msra.mxu0 0.0
        %301 = vmatprep.subr.mxu0 0.0
        %302 = vmatpush1.xpose.msra.mxu0 0.0
        %303 = vmatprep.subr.mxu0 0.0
        %304 = vmatpush1.xpose.msra.mxu0 0.0
        %305 = vmatprep.subr.mxu0 0.0
        %306 = vmatpush1.xpose.msra.mxu0 0.0
        %307 = vmatprep.subr.mxu0 0.0
        %308 = vmatpush1.xpose.msra.mxu0 0.0
        %309 = vmatprep.subr.mxu0 0.0
        %310 = vmatpush1.xpose.msra.mxu0 0.0
        %311 = vmatprep.subr.mxu0 0.0
        %312 = vmatpush1.xpose.msra.mxu0 0.0
        %313 = vmatprep.subr.mxu0 0.0
        %v314 = vand.u32 %v281, 4294901760
        %315 = vmatpush1.xpose.msra.mxu0 %v314
        %316 = vmatprep.subr.mxu0 0.0
        %317 = vmatpush2.xpose.msra.mxu0 0.0
        %318 = vmatprep.subr.mxu0 0.0
        %319 = vmatpush2.xpose.msra.mxu0 0.0
        %320 = vmatprep.subr.mxu0 0.0
        %321 = vmatpush2.xpose.msra.mxu0 0.0
        %322 = vmatprep.subr.mxu0 0.0
        %323 = vmatpush2.xpose.msra.mxu0 0.0
        %324 = vmatprep.subr.mxu0 0.0
        %325 = vmatpush2.xpose.msra.mxu0 0.0
        %326 = vmatprep.subr.mxu0 0.0
        %327 = vmatpush2.xpose.msra.mxu0 0.0
        %328 = vmatprep.subr.mxu0 0.0
        %329 = vmatpush2.xpose.msra.mxu0 0.0
        %330 = vmatprep.subr.mxu0 0.0
        %331 = vmatpush2.xpose.msra.mxu0 0.0
        %332 = vmatprep.subr.mxu0 0.0
        %333 = vmatpush2.xpose.msra.mxu0 0.0
        %334 = vmatprep.subr.mxu0 0.0
        %335 = vmatpush2.xpose.msra.mxu0 0.0
        %336 = vmatprep.subr.mxu0 0.0
        %337 = vmatpush2.xpose.msra.mxu0 0.0
        %338 = vmatprep.subr.mxu0 0.0
        %339 = vmatpush2.xpose.msra.mxu0 0.0
        %340 = vmatprep.subr.mxu0 0.0
        %341 = vmatpush2.xpose.msra.mxu0 0.0
        %342 = vmatprep.subr.mxu0 0.0
        %343 = vmatpush2.xpose.msra.mxu0 0.0
        %344 = vmatprep.subr.mxu0 0.0
        %345 = vmatpush2.xpose.msra.mxu0 0.0
        %346 = vmatprep.subr.mxu0 0.0
        %347 = vmatpush2.xpose.msra.mxu0 0.0
        %348 = vmatprep.mubr.f32.mxu0 0.0
        %v349 = vand.u32 %v275, 4294901760
        %v350 = vsub.f32 %v275, %v349
        %v351 = vand.u32 %v350, 4294901760
        %v352 = vsub.f32 %v350, %v351
        %v353 = vand.u32 %v352, 4294901760
        %354 = vmatmul.mubr.f32.gmra.mxu0 %v353
        %v355 = vpop.f32.mrf.mxu0
        %v356 = vadd.f32 0.0, %v355
        %v357 = vpop.f32.mrf.mxu0
        %358 = vmatprep.mubr.f32.mxu0 0.0
        %v359 = vand.u32 %v278, 4294901760
        %v360 = vsub.f32 %v278, %v359
        %v361 = vand.u32 %v360, 4294901760
        %v362 = vsub.f32 %v360, %v361
        %v363 = vand.u32 %v362, 4294901760
        %364 = vmatmul.mubr.f32.gmra.mxu0 %v363
        %v365 = vpop.f32.mrf.mxu0
        %v366 = vadd.f32 0.0, %v365
        %v367 = vpop.f32.mrf.mxu0
        %368 = vdwg.mxu0
        %369 = vmatprep.subr.mxu0 0.0
        %370 = vmatpush1.xpose.msra.mxu0 0.0
        %371 = vmatprep.subr.mxu0 0.0
        %372 = vmatpush1.xpose.msra.mxu0 0.0
        %373 = vmatprep.subr.mxu0 0.0
        %374 = vmatpush1.xpose.msra.mxu0 0.0
        %375 = vmatprep.subr.mxu0 0.0
        %376 = vmatpush1.xpose.msra.mxu0 0.0
        %377 = vmatprep.subr.mxu0 0.0
        %378 = vmatpush1.xpose.msra.mxu0 0.0
        %379 = vmatprep.subr.mxu0 0.0
        %380 = vmatpush1.xpose.msra.mxu0 0.0
        %381 = vmatprep.subr.mxu0 0.0
        %382 = vmatpush1.xpose.msra.mxu0 0.0
        %383 = vmatprep.subr.mxu0 0.0
        %384 = vmatpush1.xpose.msra.mxu0 0.0
        %385 = vmatprep.subr.mxu0 0.0
        %386 = vmatpush1.xpose.msra.mxu0 0.0
        %387 = vmatprep.subr.mxu0 0.0
        %388 = vmatpush1.xpose.msra.mxu0 0.0
        %389 = vmatprep.subr.mxu0 0.0
        %390 = vmatpush1.xpose.msra.mxu0 0.0
        %391 = vmatprep.subr.mxu0 0.0
        %392 = vmatpush1.xpose.msra.mxu0 0.0
        %393 = vmatprep.subr.mxu0 0.0
        %394 = vmatpush1.xpose.msra.mxu0 0.0
        %395 = vmatprep.subr.mxu0 0.0
        %396 = vmatpush1.xpose.msra.mxu0 0.0
        %397 = vmatprep.subr.mxu0 0.0
        %398 = vmatpush1.xpose.msra.mxu0 0.0
        %399 = vmatprep.subr.mxu0 0.0
        %v400 = vand.u32 %v281, 4294901760
        %v401 = vsub.f32 %v281, %v400
        %v402 = vand.u32 %v401, 4294901760
        %v403 = vsub.f32 %v401, %v402
        %v404 = vand.u32 %v403, 4294901760
        %405 = vmatpush1.xpose.msra.mxu0 %v404
        %406 = vmatprep.subr.mxu0 0.0
        %407 = vmatpush2.xpose.msra.mxu0 0.0
        %408 = vmatprep.subr.mxu0 0.0
        %409 = vmatpush2.xpose.msra.mxu0 0.0
        %410 = vmatprep.subr.mxu0 0.0
        %411 = vmatpush2.xpose.msra.mxu0 0.0
        %412 = vmatprep.subr.mxu0 0.0
        %413 = vmatpush2.xpose.msra.mxu0 0.0
        %414 = vmatprep.subr.mxu0 0.0
        %415 = vmatpush2.xpose.msra.mxu0 0.0
        %416 = vmatprep.subr.mxu0 0.0
        %417 = vmatpush2.xpose.msra.mxu0 0.0
        %418 = vmatprep.subr.mxu0 0.0
        %419 = vmatpush2.xpose.msra.mxu0 0.0
        %420 = vmatprep.subr.mxu0 0.0
        %421 = vmatpush2.xpose.msra.mxu0 0.0
        %422 = vmatprep.subr.mxu0 0.0
        %423 = vmatpush2.xpose.msra.mxu0 0.0
        %424 = vmatprep.subr.mxu0 0.0
        %425 = vmatpush2.xpose.msra.mxu0 0.0
        %426 = vmatprep.subr.mxu0 0.0
        %427 = vmatpush2.xpose.msra.mxu0 0.0
        %428 = vmatprep.subr.mxu0 0.0
        %429 = vmatpush2.xpose.msra.mxu0 0.0
        %430 = vmatprep.subr.mxu0 0.0
        %431 = vmatpush2.xpose.msra.mxu0 0.0
        %432 = vmatprep.subr.mxu0 0.0
        %433 = vmatpush2.xpose.msra.mxu0 0.0
        %434 = vmatprep.subr.mxu0 0.0
        %435 = vmatpush2.xpose.msra.mxu0 0.0
        %436 = vmatprep.subr.mxu0 0.0
        %437 = vmatpush2.xpose.msra.mxu0 0.0
        %438 = vmatprep.mubr.f32.mxu0 0.0
        %v439 = vand.u32 %v275, 4294901760
        %440 = vmatmul.mubr.f32.gmra.mxu0 %v439
        %v441 = vpop.f32.mrf.mxu0
        %v442 = vadd.f32 %v356, %v441
        %v443 = vpop.f32.mrf.mxu0
        %444 = vmatprep.mubr.f32.mxu0 0.0
        %v445 = vand.u32 %v278, 4294901760
        %446 = vmatmul.mubr.f32.gmra.mxu0 %v445
        %v447 = vpop.f32.mrf.mxu0
        %v448 = vadd.f32 %v366, %v447
        %v449 = vpop.f32.mrf.mxu0
        %450 = vdwg.mxu0
        %451 = vmatprep.subr.mxu0 0.0
        %452 = vmatpush1.xpose.msra.mxu0 0.0
        %453 = vmatprep.subr.mxu0 0.0
        %454 = vmatpush1.xpose.msra.mxu0 0.0
        %455 = vmatprep.subr.mxu0 0.0
        %456 = vmatpush1.xpose.msra.mxu0 0.0
        %457 = vmatprep.subr.mxu0 0.0
        %458 = vmatpush1.xpose.msra.mxu0 0.0
        %459 = vmatprep.subr.mxu0 0.0
        %460 = vmatpush1.xpose.msra.mxu0 0.0
        %461 = vmatprep.subr.mxu0 0.0
        %462 = vmatpush1.xpose.msra.mxu0 0.0
        %463 = vmatprep.subr.mxu0 0.0
        %464 = vmatpush1.xpose.msra.mxu0 0.0
        %465 = vmatprep.subr.mxu0 0.0
        %466 = vmatpush1.xpose.msra.mxu0 0.0
        %467 = vmatprep.subr.mxu0 0.0
        %468 = vmatpush1.xpose.msra.mxu0 0.0
        %469 = vmatprep.subr.mxu0 0.0
        %470 = vmatpush1.xpose.msra.mxu0 0.0
        %471 = vmatprep.subr.mxu0 0.0
        %472 = vmatpush1.xpose.msra.mxu0 0.0
        %473 = vmatprep.subr.mxu0 0.0
        %474 = vmatpush1.xpose.msra.mxu0 0.0
        %475 = vmatprep.subr.mxu0 0.0
        %476 = vmatpush1.xpose.msra.mxu0 0.0
        %477 = vmatprep.subr.mxu0 0.0
        %478 = vmatpush1.xpose.msra.mxu0 0.0
        %479 = vmatprep.subr.mxu0 0.0
        %480 = vmatpush1.xpose.msra.mxu0 0.0
        %481 = vmatprep.subr.mxu0 0.0
        %v482 = vand.u32 %v281, 4294901760
        %v483 = vsub.f32 %v281, %v482
        %484 = vmatpush1.xpose.msra.mxu0 %v483
        %485 = vmatprep.subr.mxu0 0.0
        %486 = vmatpush2.xpose.msra.mxu0 0.0
        %487 = vmatprep.subr.mxu0 0.0
        %488 = vmatpush2.xpose.msra.mxu0 0.0
        %489 = vmatprep.subr.mxu0 0.0
        %490 = vmatpush2.xpose.msra.mxu0 0.0
        %491 = vmatprep.subr.mxu0 0.0
        %492 = vmatpush2.xpose.msra.mxu0 0.0
        %493 = vmatprep.subr.mxu0 0.0
        %494 = vmatpush2.xpose.msra.mxu0 0.0
        %495 = vmatprep.subr.mxu0 0.0
        %496 = vmatpush2.xpose.msra.mxu0 0.0
        %497 = vmatprep.subr.mxu0 0.0
        %498 = vmatpush2.xpose.msra.mxu0 0.0
        %499 = vmatprep.subr.mxu0 0.0
        %500 = vmatpush2.xpose.msra.mxu0 0.0
        %501 = vmatprep.subr.mxu0 0.0
        %502 = vmatpush2.xpose.msra.mxu0 0.0
        %503 = vmatprep.subr.mxu0 0.0
        %504 = vmatpush2.xpose.msra.mxu0 0.0
        %505 = vmatprep.subr.mxu0 0.0
        %506 = vmatpush2.xpose.msra.mxu0 0.0
        %507 = vmatprep.subr.mxu0 0.0
        %508 = vmatpush2.xpose.msra.mxu0 0.0
        %509 = vmatprep.subr.mxu0 0.0
        %510 = vmatpush2.xpose.msra.mxu0 0.0
        %511 = vmatprep.subr.mxu0 0.0
        %512 = vmatpush2.xpose.msra.mxu0 0.0
        %513 = vmatprep.subr.mxu0 0.0
        %514 = vmatpush2.xpose.msra.mxu0 0.0
        %515 = vmatprep.subr.mxu0 0.0
        %516 = vmatpush2.xpose.msra.mxu0 0.0
        %517 = vmatprep.mubr.f32.mxu0 0.0
        %v518 = vand.u32 %v275, 4294901760
        %v519 = vsub.f32 %v275, %v518
        %520 = vmatmul.mubr.f32.gmra.mxu0 %v519
        %v521 = vpop.f32.mrf.mxu0
        %v522 = vadd.f32 %v442, %v521
        %v523 = vpop.f32.mrf.mxu0
        %524 = vmatprep.mubr.f32.mxu0 0.0
        %v525 = vand.u32 %v278, 4294901760
        %v526 = vsub.f32 %v278, %v525
        %527 = vmatmul.mubr.f32.gmra.mxu0 %v526
        %v528 = vpop.f32.mrf.mxu0
        %v529 = vadd.f32 %v448, %v528
        %v530 = vpop.f32.mrf.mxu0
        %531 = vdwg.mxu0
        %532 = vmatprep.subr.mxu0 0.0
        %533 = vmatpush1.xpose.msra.mxu0 0.0
        %534 = vmatprep.subr.mxu0 0.0
        %535 = vmatpush1.xpose.msra.mxu0 0.0
        %536 = vmatprep.subr.mxu0 0.0
        %537 = vmatpush1.xpose.msra.mxu0 0.0
        %538 = vmatprep.subr.mxu0 0.0
        %539 = vmatpush1.xpose.msra.mxu0 0.0
        %540 = vmatprep.subr.mxu0 0.0
        %541 = vmatpush1.xpose.msra.mxu0 0.0
        %542 = vmatprep.subr.mxu0 0.0
        %543 = vmatpush1.xpose.msra.mxu0 0.0
        %544 = vmatprep.subr.mxu0 0.0
        %545 = vmatpush1.xpose.msra.mxu0 0.0
        %546 = vmatprep.subr.mxu0 0.0
        %547 = vmatpush1.xpose.msra.mxu0 0.0
        %548 = vmatprep.subr.mxu0 0.0
        %549 = vmatpush1.xpose.msra.mxu0 0.0
        %550 = vmatprep.subr.mxu0 0.0
        %551 = vmatpush1.xpose.msra.mxu0 0.0
        %552 = vmatprep.subr.mxu0 0.0
        %553 = vmatpush1.xpose.msra.mxu0 0.0
        %554 = vmatprep.subr.mxu0 0.0
        %555 = vmatpush1.xpose.msra.mxu0 0.0
        %556 = vmatprep.subr.mxu0 0.0
        %557 = vmatpush1.xpose.msra.mxu0 0.0
        %558 = vmatprep.subr.mxu0 0.0
        %559 = vmatpush1.xpose.msra.mxu0 0.0
        %560 = vmatprep.subr.mxu0 0.0
        %561 = vmatpush1.xpose.msra.mxu0 0.0
        %562 = vmatprep.subr.mxu0 0.0
        %v563 = vand.u32 %v281, 4294901760
        %564 = vmatpush1.xpose.msra.mxu0 %v563
        %565 = vmatprep.subr.mxu0 0.0
        %566 = vmatpush2.xpose.msra.mxu0 0.0
        %567 = vmatprep.subr.mxu0 0.0
        %568 = vmatpush2.xpose.msra.mxu0 0.0
        %569 = vmatprep.subr.mxu0 0.0
        %570 = vmatpush2.xpose.msra.mxu0 0.0
        %571 = vmatprep.subr.mxu0 0.0
        %572 = vmatpush2.xpose.msra.mxu0 0.0
        %573 = vmatprep.subr.mxu0 0.0
        %574 = vmatpush2.xpose.msra.mxu0 0.0
        %575 = vmatprep.subr.mxu0 0.0
        %576 = vmatpush2.xpose.msra.mxu0 0.0
        %577 = vmatprep.subr.mxu0 0.0
        %578 = vmatpush2.xpose.msra.mxu0 0.0
        %579 = vmatprep.subr.mxu0 0.0
        %580 = vmatpush2.xpose.msra.mxu0 0.0
        %581 = vmatprep.subr.mxu0 0.0
        %582 = vmatpush2.xpose.msra.mxu0 0.0
        %583 = vmatprep.subr.mxu0 0.0
        %584 = vmatpush2.xpose.msra.mxu0 0.0
        %585 = vmatprep.subr.mxu0 0.0
        %586 = vmatpush2.xpose.msra.mxu0 0.0
        %587 = vmatprep.subr.mxu0 0.0
        %588 = vmatpush2.xpose.msra.mxu0 0.0
        %589 = vmatprep.subr.mxu0 0.0
        %590 = vmatpush2.xpose.msra.mxu0 0.0
        %591 = vmatprep.subr.mxu0 0.0
        %592 = vmatpush2.xpose.msra.mxu0 0.0
        %593 = vmatprep.subr.mxu0 0.0
        %594 = vmatpush2.xpose.msra.mxu0 0.0
        %595 = vmatprep.subr.mxu0 0.0
        %596 = vmatpush2.xpose.msra.mxu0 0.0
        %597 = vmatprep.mubr.f32.mxu0 0.0
        %v598 = vand.u32 %v275, 4294901760
        %v599 = vsub.f32 %v275, %v598
        %v600 = vand.u32 %v599, 4294901760
        %601 = vmatmul.mubr.f32.gmra.mxu0 %v600
        %v602 = vpop.f32.mrf.mxu0
        %v603 = vadd.f32 %v522, %v602
        %v604 = vpop.f32.mrf.mxu0
        %605 = vmatprep.mubr.f32.mxu0 0.0
        %v606 = vand.u32 %v278, 4294901760
        %v607 = vsub.f32 %v278, %v606
        %v608 = vand.u32 %v607, 4294901760
        %609 = vmatmul.mubr.f32.gmra.mxu0 %v608
        %v610 = vpop.f32.mrf.mxu0
        %v611 = vadd.f32 %v529, %v610
        %v612 = vpop.f32.mrf.mxu0
        %613 = vdwg.mxu0
        %614 = vmatprep.subr.mxu0 0.0
        %615 = vmatpush1.xpose.msra.mxu0 0.0
        %616 = vmatprep.subr.mxu0 0.0
        %617 = vmatpush1.xpose.msra.mxu0 0.0
        %618 = vmatprep.subr.mxu0 0.0
        %619 = vmatpush1.xpose.msra.mxu0 0.0
        %620 = vmatprep.subr.mxu0 0.0
        %621 = vmatpush1.xpose.msra.mxu0 0.0
        %622 = vmatprep.subr.mxu0 0.0
        %623 = vmatpush1.xpose.msra.mxu0 0.0
        %624 = vmatprep.subr.mxu0 0.0
        %625 = vmatpush1.xpose.msra.mxu0 0.0
        %626 = vmatprep.subr.mxu0 0.0
        %627 = vmatpush1.xpose.msra.mxu0 0.0
        %628 = vmatprep.subr.mxu0 0.0
        %629 = vmatpush1.xpose.msra.mxu0 0.0
        %630 = vmatprep.subr.mxu0 0.0
        %631 = vmatpush1.xpose.msra.mxu0 0.0
        %632 = vmatprep.subr.mxu0 0.0
        %633 = vmatpush1.xpose.msra.mxu0 0.0
        %634 = vmatprep.subr.mxu0 0.0
        %635 = vmatpush1.xpose.msra.mxu0 0.0
        %636 = vmatprep.subr.mxu0 0.0
        %637 = vmatpush1.xpose.msra.mxu0 0.0
        %638 = vmatprep.subr.mxu0 0.0
        %639 = vmatpush1.xpose.msra.mxu0 0.0
        %640 = vmatprep.subr.mxu0 0.0
        %641 = vmatpush1.xpose.msra.mxu0 0.0
        %642 = vmatprep.subr.mxu0 0.0
        %643 = vmatpush1.xpose.msra.mxu0 0.0
        %644 = vmatprep.subr.mxu0 0.0
        %v645 = vand.u32 %v281, 4294901760
        %v646 = vsub.f32 %v281, %v645
        %v647 = vand.u32 %v646, 4294901760
        %648 = vmatpush1.xpose.msra.mxu0 %v647
        %649 = vmatprep.subr.mxu0 0.0
        %650 = vmatpush2.xpose.msra.mxu0 0.0
        %651 = vmatprep.subr.mxu0 0.0
        %652 = vmatpush2.xpose.msra.mxu0 0.0
        %653 = vmatprep.subr.mxu0 0.0
        %654 = vmatpush2.xpose.msra.mxu0 0.0
        %655 = vmatprep.subr.mxu0 0.0
        %656 = vmatpush2.xpose.msra.mxu0 0.0
        %657 = vmatprep.subr.mxu0 0.0
        %658 = vmatpush2.xpose.msra.mxu0 0.0
        %659 = vmatprep.subr.mxu0 0.0
        %660 = vmatpush2.xpose.msra.mxu0 0.0
        %661 = vmatprep.subr.mxu0 0.0
        %662 = vmatpush2.xpose.msra.mxu0 0.0
        %663 = vmatprep.subr.mxu0 0.0
        %664 = vmatpush2.xpose.msra.mxu0 0.0
        %665 = vmatprep.subr.mxu0 0.0
        %666 = vmatpush2.xpose.msra.mxu0 0.0
        %667 = vmatprep.subr.mxu0 0.0
        %668 = vmatpush2.xpose.msra.mxu0 0.0
        %669 = vmatprep.subr.mxu0 0.0
        %670 = vmatpush2.xpose.msra.mxu0 0.0
        %671 = vmatprep.subr.mxu0 0.0
        %672 = vmatpush2.xpose.msra.mxu0 0.0
        %673 = vmatprep.subr.mxu0 0.0
        %674 = vmatpush2.xpose.msra.mxu0 0.0
        %675 = vmatprep.subr.mxu0 0.0
        %676 = vmatpush2.xpose.msra.mxu0 0.0
        %677 = vmatprep.subr.mxu0 0.0
        %678 = vmatpush2.xpose.msra.mxu0 0.0
        %679 = vmatprep.subr.mxu0 0.0
        %680 = vmatpush2.xpose.msra.mxu0 0.0
        %681 = vmatprep.mubr.f32.mxu0 0.0
        %v682 = vand.u32 %v275, 4294901760
        %683 = vmatmul.mubr.f32.gmra.mxu0 %v682
        %v684 = vpop.f32.mrf.mxu0
        %v685 = vadd.f32 %v603, %v684
        %v686 = vpop.f32.mrf.mxu0
        %687 = vmatprep.mubr.f32.mxu0 0.0
        %v688 = vand.u32 %v278, 4294901760
        %689 = vmatmul.mubr.f32.gmra.mxu0 %v688
        %v690 = vpop.f32.mrf.mxu0
        %v691 = vadd.f32 %v611, %v690
        %v692 = vpop.f32.mrf.mxu0
        %693 = vdwg.mxu0
        %694 = vmatprep.subr.mxu0 0.0
        %695 = vmatpush1.xpose.msra.mxu0 0.0
        %696 = vmatprep.subr.mxu0 0.0
        %697 = vmatpush1.xpose.msra.mxu0 0.0
        %698 = vmatprep.subr.mxu0 0.0
        %699 = vmatpush1.xpose.msra.mxu0 0.0
        %700 = vmatprep.subr.mxu0 0.0
        %701 = vmatpush1.xpose.msra.mxu0 0.0
        %702 = vmatprep.subr.mxu0 0.0
        %703 = vmatpush1.xpose.msra.mxu0 0.0
        %704 = vmatprep.subr.mxu0 0.0
        %705 = vmatpush1.xpose.msra.mxu0 0.0
        %706 = vmatprep.subr.mxu0 0.0
        %707 = vmatpush1.xpose.msra.mxu0 0.0
        %708 = vmatprep.subr.mxu0 0.0
        %709 = vmatpush1.xpose.msra.mxu0 0.0
        %710 = vmatprep.subr.mxu0 0.0
        %711 = vmatpush1.xpose.msra.mxu0 0.0
        %712 = vmatprep.subr.mxu0 0.0
        %713 = vmatpush1.xpose.msra.mxu0 0.0
        %714 = vmatprep.subr.mxu0 0.0
        %715 = vmatpush1.xpose.msra.mxu0 0.0
        %716 = vmatprep.subr.mxu0 0.0
        %717 = vmatpush1.xpose.msra.mxu0 0.0
        %718 = vmatprep.subr.mxu0 0.0
        %719 = vmatpush1.xpose.msra.mxu0 0.0
        %720 = vmatprep.subr.mxu0 0.0
        %721 = vmatpush1.xpose.msra.mxu0 0.0
        %722 = vmatprep.subr.mxu0 0.0
        %723 = vmatpush1.xpose.msra.mxu0 0.0
        %724 = vmatprep.subr.mxu0 0.0
        %v725 = vand.u32 %v281, 4294901760
        %726 = vmatpush1.xpose.msra.mxu0 %v725
        %727 = vmatprep.subr.mxu0 0.0
        %728 = vmatpush2.xpose.msra.mxu0 0.0
        %729 = vmatprep.subr.mxu0 0.0
        %730 = vmatpush2.xpose.msra.mxu0 0.0
        %731 = vmatprep.subr.mxu0 0.0
        %732 = vmatpush2.xpose.msra.mxu0 0.0
        %733 = vmatprep.subr.mxu0 0.0
        %734 = vmatpush2.xpose.msra.mxu0 0.0
        %735 = vmatprep.subr.mxu0 0.0
        %736 = vmatpush2.xpose.msra.mxu0 0.0
        %737 = vmatprep.subr.mxu0 0.0
        %738 = vmatpush2.xpose.msra.mxu0 0.0
        %739 = vmatprep.subr.mxu0 0.0
        %740 = vmatpush2.xpose.msra.mxu0 0.0
        %741 = vmatprep.subr.mxu0 0.0
        %742 = vmatpush2.xpose.msra.mxu0 0.0
        %743 = vmatprep.subr.mxu0 0.0
        %744 = vmatpush2.xpose.msra.mxu0 0.0
        %745 = vmatprep.subr.mxu0 0.0
        %746 = vmatpush2.xpose.msra.mxu0 0.0
        %747 = vmatprep.subr.mxu0 0.0
        %748 = vmatpush2.xpose.msra.mxu0 0.0
        %749 = vmatprep.subr.mxu0 0.0
        %750 = vmatpush2.xpose.msra.mxu0 0.0
        %751 = vmatprep.subr.mxu0 0.0
        %752 = vmatpush2.xpose.msra.mxu0 0.0
        %753 = vmatprep.subr.mxu0 0.0
        %754 = vmatpush2.xpose.msra.mxu0 0.0
        %755 = vmatprep.subr.mxu0 0.0
        %756 = vmatpush2.xpose.msra.mxu0 0.0
        %757 = vmatprep.subr.mxu0 0.0
        %758 = vmatpush2.xpose.msra.mxu0 0.0
        %759 = vmatprep.mubr.f32.mxu0 0.0
        %v760 = vand.u32 %v275, 4294901760
        %761 = vmatmul.mubr.f32.gmra.mxu0 %v760
        %v762 = vpop.f32.mrf.mxu0
        %v763 = vadd.f32 %v685, %v762
        %v764 = vpop.f32.mrf.mxu0
        %765 = vmatprep.mubr.f32.mxu0 0.0
        %v766 = vand.u32 %v278, 4294901760
        %767 = vmatmul.mubr.f32.gmra.mxu0 %v766
        %v768 = vpop.f32.mrf.mxu0
        %v769 = vadd.f32 %v691, %v768
        %v770 = vpop.f32.mrf.mxu0
        %771 = vdwg.mxu0
        %vm772 = vcmp.gt.f32.partialorder %v272, 0.0
        %v773 = vsel %vm772, 1, 0
        %v774 = vlaneseq
        %v775 = vshrl.u32 %v774, 7
        %v776 = vsub.s32 0, %v775
        %v777 = vrot.slane %v773, %v776
        %vm778 = vcmp.eq.s32.totalorder %v777, 1
        %v779 = vsel %vm778, %v763, -1e+30
        %v780 = vsel %vm778, %v769, -1e+30
        %vm781 = vcmask 64512
        %v782 = vsel %vm781, %v779, -inf
        %783 = vmax.xlane.f32.xlu0 %v782
        %v784 = vpop.xlane.xlu0 %783
        %v785 = vsel %vm781, %v780, -inf
        %786 = vmax.xlane.f32.xlu0 %v785
        %v787 = vpop.xlane.xlu0 %786
        %v788 = vsub.f32 %v779, %v784
        %v789 = vsub.f32 %v780, %v787
        %v790 = vmul.f32 %v788, 1.442695
        %v791 = vpow.pop %v790
        %v792 = vmul.f32 %v789, 1.442695
        %v793 = vpow.pop %v792
        %v794 = vsel %vm781, %v791, 0.0
        %795 = vadd.xlane.f32.xlu0 %v794
        %v796 = vpop.xlane.xlu0 %795
        %v797 = vsel %vm781, %v793, 0.0
        %798 = vadd.xlane.f32.xlu0 %v797
        %v799 = vpop.xlane.xlu0 %798
        %v800 = vrcp.pop %v796
        %v801 = vmul.f32 %v791, %v800
        %v802 = vrcp.pop %v799
        %v803 = vmul.f32 %v793, %v802
        %vm804 = vcmp.gt.f32.partialorder %v270, 0.0
        %vm805 = vcmp.gt.f32.partialorder %v271, 0.0
        %v806 = vsel %vm804, 1, 0
        %v807 = vsel %vm805, 1, 0
        %808 = vset.pattern.permute.xlu0 0
        %809 = vperm.xlu0 %808, %v806
        %v810 = vpop.permute.xlu0 %809
        %811 = vset.pattern.permute.xlu0 0
        %812 = vperm.xlu0 %811, %v807
        %v813 = vpop.permute.xlu0 %812
        %vm814 = vcmp.eq.s32.totalorder %v810, 1
        %vm815 = vcmp.eq.s32.totalorder %v813, 1
        %v816 = vsel %vm814, %v763, -1e+30
        %v817 = vsel %vm815, %v769, -1e+30
        %v818 = vsel %vm781, %v816, -inf
        %v819 = vsel %vm781, %v817, -inf
        %v820 = vmax.f32 %v818, %v819
        %v821 = vrot.slane %v820, 4
        %v822 = vmax.f32 %v820, %v821
        %v823 = vrot.slane %v822, 2
        %v824 = vmax.f32 %v822, %v823
        %v825 = vrot.slane %v824, 1
        %v826 = vmax.f32 %v824, %v825
        %v827 = vsub.f32 %v816, %v826
        %v828 = vsub.f32 %v817, %v826
        %v829 = vmul.f32 %v827, 1.442695
        %v830 = vpow.pop %v829
        %v831 = vmul.f32 %v828, 1.442695
        %v832 = vpow.pop %v831
        %v833 = vsel %vm781, %v830, 0.0
        %v834 = vsel %vm781, %v832, 0.0
        %v835 = vadd.f32 %v833, %v834
        %v836 = vrot.slane %v835, 4
        %v837 = vadd.f32 %v835, %v836
        %v838 = vrot.slane %v837, 2
        %v839 = vadd.f32 %v837, %v838
        %v840 = vrot.slane %v839, 1
        %v841 = vadd.f32 %v839, %v840
        %v842 = vrcp.pop %v841
        %v843 = vmul.f32 %v830, %v842
        %v844 = vmul.f32 %v832, %v842
        %845 = vxpose.xlu0.b32.start [1/16] %v843, 128
        %846 = vxpose.xlu0.b32.cont [2/16] %v844, 128
        %847 = vxpose.xlu0.b32.cont [3/16] 0.0, 128
        %848 = vxpose.xlu0.b32.cont [4/16] 0.0, 128
        %849 = vxpose.xlu0.b32.cont [5/16] 0.0, 128
        %850 = vxpose.xlu0.b32.cont [6/16] 0.0, 128
        %851 = vxpose.xlu0.b32.cont [7/16] 0.0, 128
        %852 = vxpose.xlu0.b32.cont [8/16] 0.0, 128
        %853 = vxpose.xlu0.b32.cont [9/16] 0.0, 128
        %854 = vxpose.xlu0.b32.cont [10/16] 0.0, 128
        %855 = vxpose.xlu0.b32.cont [11/16] 0.0, 128
        %856 = vxpose.xlu0.b32.cont [12/16] 0.0, 128
        %857 = vxpose.xlu0.b32.cont [13/16] 0.0, 128
        %858 = vxpose.xlu0.b32.cont [14/16] 0.0, 128
        %859 = vxpose.xlu0.b32.cont [15/16] 0.0, 128
        %860 = vxpose.xlu0.b32.end [16/16] 0.0, 128
        %v861 = vpop.trf.xlu0
        %v862 = vpop.trf.xlu0
        %v863 = vpop.trf.xlu0
        %v864 = vpop.trf.xlu0
        %v865 = vpop.trf.xlu0
        %v866 = vpop.trf.xlu0
        %v867 = vpop.trf.xlu0
        %v868 = vpop.trf.xlu0
        %v869 = vpop.trf.xlu0
        %v870 = vpop.trf.xlu0
        %v871 = vpop.trf.xlu0
        %v872 = vpop.trf.xlu0
        %v873 = vpop.trf.xlu0
        %v874 = vpop.trf.xlu0
        %v875 = vpop.trf.xlu0
        %v876 = vpop.trf.xlu0
        %vm877 = vcmask 130048
        %v879 = vsel %vm877, %v861, 0
        %881 = vmatprep.subr.mxu0 0.0
        %882 = vmatpush1.msra.mxu0 0.0
        %883 = vmatprep.subr.mxu0 0.0
        %884 = vmatpush1.msra.mxu0 0.0
        %885 = vmatprep.subr.mxu0 0.0
        %886 = vmatpush1.msra.mxu0 0.0
        %887 = vmatprep.subr.mxu0 0.0
        %888 = vmatpush1.msra.mxu0 0.0
        %889 = vmatprep.subr.mxu0 0.0
        %890 = vmatpush1.msra.mxu0 0.0
        %891 = vmatprep.subr.mxu0 0.0
        %892 = vmatpush1.msra.mxu0 0.0
        %893 = vmatprep.subr.mxu0 0.0
        %894 = vmatpush1.msra.mxu0 0.0
        %895 = vmatprep.subr.mxu0 0.0
        %896 = vmatpush1.msra.mxu0 0.0
        %897 = vmatprep.subr.mxu0 0.0
        %898 = vmatpush1.msra.mxu0 0.0
        %899 = vmatprep.subr.mxu0 0.0
        %900 = vmatpush1.msra.mxu0 0.0
        %901 = vmatprep.subr.mxu0 0.0
        %902 = vmatpush1.msra.mxu0 0.0
        %903 = vmatprep.subr.mxu0 0.0
        %904 = vmatpush1.msra.mxu0 0.0
        %905 = vmatprep.subr.mxu0 0.0
        %906 = vmatpush1.msra.mxu0 0.0
        %907 = vmatprep.subr.mxu0 0.0
        %908 = vmatpush1.msra.mxu0 0.0
        %909 = vmatprep.subr.mxu0 0.0
        %v910 = vand.u32 %v268, 4294901760
        %911 = vmatpush1.msra.mxu0 %v910
        %912 = vmatprep.subr.mxu0 0.0
        %v913 = vand.u32 %v267, 4294901760
        %914 = vmatpush1.msra.mxu0 %v913
        %915 = vmatprep.subr.mxu0 0.0
        %916 = vmatpush2.msra.mxu0 0.0
        %917 = vmatprep.subr.mxu0 0.0
        %918 = vmatpush2.msra.mxu0 0.0
        %919 = vmatprep.subr.mxu0 0.0
        %920 = vmatpush2.msra.mxu0 0.0
        %921 = vmatprep.subr.mxu0 0.0
        %922 = vmatpush2.msra.mxu0 0.0
        %923 = vmatprep.subr.mxu0 0.0
        %924 = vmatpush2.msra.mxu0 0.0
        %925 = vmatprep.subr.mxu0 0.0
        %926 = vmatpush2.msra.mxu0 0.0
        %927 = vmatprep.subr.mxu0 0.0
        %928 = vmatpush2.msra.mxu0 0.0
        %929 = vmatprep.subr.mxu0 0.0
        %930 = vmatpush2.msra.mxu0 0.0
        %931 = vmatprep.subr.mxu0 0.0
        %932 = vmatpush2.msra.mxu0 0.0
        %933 = vmatprep.subr.mxu0 0.0
        %934 = vmatpush2.msra.mxu0 0.0
        %935 = vmatprep.subr.mxu0 0.0
        %936 = vmatpush2.msra.mxu0 0.0
        %937 = vmatprep.subr.mxu0 0.0
        %938 = vmatpush2.msra.mxu0 0.0
        %939 = vmatprep.subr.mxu0 0.0
        %940 = vmatpush2.msra.mxu0 0.0
        %941 = vmatprep.subr.mxu0 0.0
        %942 = vmatpush2.msra.mxu0 0.0
        %943 = vmatprep.subr.mxu0 0.0
        %944 = vmatpush2.msra.mxu0 0.0
        %945 = vmatprep.subr.mxu0 0.0
        %946 = vmatpush2.msra.mxu0 0.0
        %947 = vmatprep.mubr.f32.mxu0 0.0
        %v948 = vand.u32 %v879, 4294901760
        %v949 = vsub.f32 %v879, %v948
        %v950 = vand.u32 %v949, 4294901760
        %v951 = vsub.f32 %v949, %v950
        %v952 = vand.u32 %v951, 4294901760
        %953 = vmatmul.mubr.f32.gmra.mxu0 %v952
        %v954 = vpop.f32.mrf.mxu0
        %v955 = vadd.f32 0.0, %v954
        %v956 = vpop.f32.mrf.mxu0
        %957 = vdwg.mxu0
        %958 = vmatprep.subr.mxu0 0.0
        %959 = vmatpush1.msra.mxu0 0.0
        %960 = vmatprep.subr.mxu0 0.0
        %961 = vmatpush1.msra.mxu0 0.0
        %962 = vmatprep.subr.mxu0 0.0
        %963 = vmatpush1.msra.mxu0 0.0
        %964 = vmatprep.subr.mxu0 0.0
        %965 = vmatpush1.msra.mxu0 0.0
        %966 = vmatprep.subr.mxu0 0.0
        %967 = vmatpush1.msra.mxu0 0.0
        %968 = vmatprep.subr.mxu0 0.0
        %969 = vmatpush1.msra.mxu0 0.0
        %970 = vmatprep.subr.mxu0 0.0
        %971 = vmatpush1.msra.mxu0 0.0
        %972 = vmatprep.subr.mxu0 0.0
        %973 = vmatpush1.msra.mxu0 0.0
        %974 = vmatprep.subr.mxu0 0.0
        %975 = vmatpush1.msra.mxu0 0.0
        %976 = vmatprep.subr.mxu0 0.0
        %977 = vmatpush1.msra.mxu0 0.0
        %978 = vmatprep.subr.mxu0 0.0
        %979 = vmatpush1.msra.mxu0 0.0
        %980 = vmatprep.subr.mxu0 0.0
        %981 = vmatpush1.msra.mxu0 0.0
        %982 = vmatprep.subr.mxu0 0.0
        %983 = vmatpush1.msra.mxu0 0.0
        %984 = vmatprep.subr.mxu0 0.0
        %985 = vmatpush1.msra.mxu0 0.0
        %986 = vmatprep.subr.mxu0 0.0
        %v987 = vand.u32 %v268, 4294901760
        %v988 = vsub.f32 %v268, %v987
        %v989 = vand.u32 %v988, 4294901760
        %v990 = vsub.f32 %v988, %v989
        %v991 = vand.u32 %v990, 4294901760
        %992 = vmatpush1.msra.mxu0 %v991
        %993 = vmatprep.subr.mxu0 0.0
        %v994 = vand.u32 %v267, 4294901760
        %v995 = vsub.f32 %v267, %v994
        %v996 = vand.u32 %v995, 4294901760
        %v997 = vsub.f32 %v995, %v996
        %v998 = vand.u32 %v997, 4294901760
        %999 = vmatpush1.msra.mxu0 %v998
        %1000 = vmatprep.subr.mxu0 0.0
        %1001 = vmatpush2.msra.mxu0 0.0
        %1002 = vmatprep.subr.mxu0 0.0
        %1003 = vmatpush2.msra.mxu0 0.0
        %1004 = vmatprep.subr.mxu0 0.0
        %1005 = vmatpush2.msra.mxu0 0.0
        %1006 = vmatprep.subr.mxu0 0.0
        %1007 = vmatpush2.msra.mxu0 0.0
        %1008 = vmatprep.subr.mxu0 0.0
        %1009 = vmatpush2.msra.mxu0 0.0
        %1010 = vmatprep.subr.mxu0 0.0
        %1011 = vmatpush2.msra.mxu0 0.0
        %1012 = vmatprep.subr.mxu0 0.0
        %1013 = vmatpush2.msra.mxu0 0.0
        %1014 = vmatprep.subr.mxu0 0.0
        %1015 = vmatpush2.msra.mxu0 0.0
        %1016 = vmatprep.subr.mxu0 0.0
        %1017 = vmatpush2.msra.mxu0 0.0
        %1018 = vmatprep.subr.mxu0 0.0
        %1019 = vmatpush2.msra.mxu0 0.0
        %1020 = vmatprep.subr.mxu0 0.0
        %1021 = vmatpush2.msra.mxu0 0.0
        %1022 = vmatprep.subr.mxu0 0.0
        %1023 = vmatpush2.msra.mxu0 0.0
        %1024 = vmatprep.subr.mxu0 0.0
        %1025 = vmatpush2.msra.mxu0 0.0
        %1026 = vmatprep.subr.mxu0 0.0
        %1027 = vmatpush2.msra.mxu0 0.0
        %1028 = vmatprep.subr.mxu0 0.0
        %1029 = vmatpush2.msra.mxu0 0.0
        %1030 = vmatprep.subr.mxu0 0.0
        %1031 = vmatpush2.msra.mxu0 0.0
        %1032 = vmatprep.mubr.f32.mxu0 0.0
        %v1033 = vand.u32 %v879, 4294901760
        %1034 = vmatmul.mubr.f32.gmra.mxu0 %v1033
        %v1035 = vpop.f32.mrf.mxu0
        %v1036 = vadd.f32 %v955, %v1035
        %v1037 = vpop.f32.mrf.mxu0
        %1038 = vdwg.mxu0
        %1039 = vmatprep.subr.mxu0 0.0
        %1040 = vmatpush1.msra.mxu0 0.0
        %1041 = vmatprep.subr.mxu0 0.0
        %1042 = vmatpush1.msra.mxu0 0.0
        %1043 = vmatprep.subr.mxu0 0.0
        %1044 = vmatpush1.msra.mxu0 0.0
        %1045 = vmatprep.subr.mxu0 0.0
        %1046 = vmatpush1.msra.mxu0 0.0
        %1047 = vmatprep.subr.mxu0 0.0
        %1048 = vmatpush1.msra.mxu0 0.0
        %1049 = vmatprep.subr.mxu0 0.0
        %1050 = vmatpush1.msra.mxu0 0.0
        %1051 = vmatprep.subr.mxu0 0.0
        %1052 = vmatpush1.msra.mxu0 0.0
        %1053 = vmatprep.subr.mxu0 0.0
        %1054 = vmatpush1.msra.mxu0 0.0
        %1055 = vmatprep.subr.mxu0 0.0
        %1056 = vmatpush1.msra.mxu0 0.0
        %1057 = vmatprep.subr.mxu0 0.0
        %1058 = vmatpush1.msra.mxu0 0.0
        %1059 = vmatprep.subr.mxu0 0.0
        %1060 = vmatpush1.msra.mxu0 0.0
        %1061 = vmatprep.subr.mxu0 0.0
        %1062 = vmatpush1.msra.mxu0 0.0
        %1063 = vmatprep.subr.mxu0 0.0
        %1064 = vmatpush1.msra.mxu0 0.0
        %1065 = vmatprep.subr.mxu0 0.0
        %1066 = vmatpush1.msra.mxu0 0.0
        %1067 = vmatprep.subr.mxu0 0.0
        %v1068 = vand.u32 %v268, 4294901760
        %v1069 = vsub.f32 %v268, %v1068
        %1070 = vmatpush1.msra.mxu0 %v1069
        %1071 = vmatprep.subr.mxu0 0.0
        %v1072 = vand.u32 %v267, 4294901760
        %v1073 = vsub.f32 %v267, %v1072
        %1074 = vmatpush1.msra.mxu0 %v1073
        %1075 = vmatprep.subr.mxu0 0.0
        %1076 = vmatpush2.msra.mxu0 0.0
        %1077 = vmatprep.subr.mxu0 0.0
        %1078 = vmatpush2.msra.mxu0 0.0
        %1079 = vmatprep.subr.mxu0 0.0
        %1080 = vmatpush2.msra.mxu0 0.0
        %1081 = vmatprep.subr.mxu0 0.0
        %1082 = vmatpush2.msra.mxu0 0.0
        %1083 = vmatprep.subr.mxu0 0.0
        %1084 = vmatpush2.msra.mxu0 0.0
        %1085 = vmatprep.subr.mxu0 0.0
        %1086 = vmatpush2.msra.mxu0 0.0
        %1087 = vmatprep.subr.mxu0 0.0
        %1088 = vmatpush2.msra.mxu0 0.0
        %1089 = vmatprep.subr.mxu0 0.0
        %1090 = vmatpush2.msra.mxu0 0.0
        %1091 = vmatprep.subr.mxu0 0.0
        %1092 = vmatpush2.msra.mxu0 0.0
        %1093 = vmatprep.subr.mxu0 0.0
        %1094 = vmatpush2.msra.mxu0 0.0
        %1095 = vmatprep.subr.mxu0 0.0
        %1096 = vmatpush2.msra.mxu0 0.0
        %1097 = vmatprep.subr.mxu0 0.0
        %1098 = vmatpush2.msra.mxu0 0.0
        %1099 = vmatprep.subr.mxu0 0.0
        %1100 = vmatpush2.msra.mxu0 0.0
        %1101 = vmatprep.subr.mxu0 0.0
        %1102 = vmatpush2.msra.mxu0 0.0
        %1103 = vmatprep.subr.mxu0 0.0
        %1104 = vmatpush2.msra.mxu0 0.0
        %1105 = vmatprep.subr.mxu0 0.0
        %1106 = vmatpush2.msra.mxu0 0.0
        %1107 = vmatprep.mubr.f32.mxu0 0.0
        %v1108 = vand.u32 %v879, 4294901760
        %v1109 = vsub.f32 %v879, %v1108
        %1110 = vmatmul.mubr.f32.gmra.mxu0 %v1109
        %v1111 = vpop.f32.mrf.mxu0
        %v1112 = vadd.f32 %v1036, %v1111
        %v1113 = vpop.f32.mrf.mxu0
        %1114 = vdwg.mxu0
        %1115 = vmatprep.subr.mxu0 0.0
        %1116 = vmatpush1.msra.mxu0 0.0
        %1117 = vmatprep.subr.mxu0 0.0
        %1118 = vmatpush1.msra.mxu0 0.0
        %1119 = vmatprep.subr.mxu0 0.0
        %1120 = vmatpush1.msra.mxu0 0.0
        %1121 = vmatprep.subr.mxu0 0.0
        %1122 = vmatpush1.msra.mxu0 0.0
        %1123 = vmatprep.subr.mxu0 0.0
        %1124 = vmatpush1.msra.mxu0 0.0
        %1125 = vmatprep.subr.mxu0 0.0
        %1126 = vmatpush1.msra.mxu0 0.0
        %1127 = vmatprep.subr.mxu0 0.0
        %1128 = vmatpush1.msra.mxu0 0.0
        %1129 = vmatprep.subr.mxu0 0.0
        %1130 = vmatpush1.msra.mxu0 0.0
        %1131 = vmatprep.subr.mxu0 0.0
        %1132 = vmatpush1.msra.mxu0 0.0
        %1133 = vmatprep.subr.mxu0 0.0
        %1134 = vmatpush1.msra.mxu0 0.0
        %1135 = vmatprep.subr.mxu0 0.0
        %1136 = vmatpush1.msra.mxu0 0.0
        %1137 = vmatprep.subr.mxu0 0.0
        %1138 = vmatpush1.msra.mxu0 0.0
        %1139 = vmatprep.subr.mxu0 0.0
        %1140 = vmatpush1.msra.mxu0 0.0
        %1141 = vmatprep.subr.mxu0 0.0
        %1142 = vmatpush1.msra.mxu0 0.0
        %1143 = vmatprep.subr.mxu0 0.0
        %v1144 = vand.u32 %v268, 4294901760
        %1145 = vmatpush1.msra.mxu0 %v1144
        %1146 = vmatprep.subr.mxu0 0.0
        %v1147 = vand.u32 %v267, 4294901760
        %1148 = vmatpush1.msra.mxu0 %v1147
        %1149 = vmatprep.subr.mxu0 0.0
        %1150 = vmatpush2.msra.mxu0 0.0
        %1151 = vmatprep.subr.mxu0 0.0
        %1152 = vmatpush2.msra.mxu0 0.0
        %1153 = vmatprep.subr.mxu0 0.0
        %1154 = vmatpush2.msra.mxu0 0.0
        %1155 = vmatprep.subr.mxu0 0.0
        %1156 = vmatpush2.msra.mxu0 0.0
        %1157 = vmatprep.subr.mxu0 0.0
        %1158 = vmatpush2.msra.mxu0 0.0
        %1159 = vmatprep.subr.mxu0 0.0
        %1160 = vmatpush2.msra.mxu0 0.0
        %1161 = vmatprep.subr.mxu0 0.0
        %1162 = vmatpush2.msra.mxu0 0.0
        %1163 = vmatprep.subr.mxu0 0.0
        %1164 = vmatpush2.msra.mxu0 0.0
        %1165 = vmatprep.subr.mxu0 0.0
        %1166 = vmatpush2.msra.mxu0 0.0
        %1167 = vmatprep.subr.mxu0 0.0
        %1168 = vmatpush2.msra.mxu0 0.0
        %1169 = vmatprep.subr.mxu0 0.0
        %1170 = vmatpush2.msra.mxu0 0.0
        %1171 = vmatprep.subr.mxu0 0.0
        %1172 = vmatpush2.msra.mxu0 0.0
        %1173 = vmatprep.subr.mxu0 0.0
        %1174 = vmatpush2.msra.mxu0 0.0
        %1175 = vmatprep.subr.mxu0 0.0
        %1176 = vmatpush2.msra.mxu0 0.0
        %1177 = vmatprep.subr.mxu0 0.0
        %1178 = vmatpush2.msra.mxu0 0.0
        %1179 = vmatprep.subr.mxu0 0.0
        %1180 = vmatpush2.msra.mxu0 0.0
        %1181 = vmatprep.mubr.f32.mxu0 0.0
        %v1182 = vand.u32 %v879, 4294901760
        %v1183 = vsub.f32 %v879, %v1182
        %v1184 = vand.u32 %v1183, 4294901760
        %1185 = vmatmul.mubr.f32.gmra.mxu0 %v1184
        %v1186 = vpop.f32.mrf.mxu0
        %v1187 = vadd.f32 %v1112, %v1186
        %v1188 = vpop.f32.mrf.mxu0
        %1189 = vdwg.mxu0
        %1190 = vmatprep.subr.mxu0 0.0
        %1191 = vmatpush1.msra.mxu0 0.0
        %1192 = vmatprep.subr.mxu0 0.0
        %1193 = vmatpush1.msra.mxu0 0.0
        %1194 = vmatprep.subr.mxu0 0.0
        %1195 = vmatpush1.msra.mxu0 0.0
        %1196 = vmatprep.subr.mxu0 0.0
        %1197 = vmatpush1.msra.mxu0 0.0
        %1198 = vmatprep.subr.mxu0 0.0
        %1199 = vmatpush1.msra.mxu0 0.0
        %1200 = vmatprep.subr.mxu0 0.0
        %1201 = vmatpush1.msra.mxu0 0.0
        %1202 = vmatprep.subr.mxu0 0.0
        %1203 = vmatpush1.msra.mxu0 0.0
        %1204 = vmatprep.subr.mxu0 0.0
        %1205 = vmatpush1.msra.mxu0 0.0
        %1206 = vmatprep.subr.mxu0 0.0
        %1207 = vmatpush1.msra.mxu0 0.0
        %1208 = vmatprep.subr.mxu0 0.0
        %1209 = vmatpush1.msra.mxu0 0.0
        %1210 = vmatprep.subr.mxu0 0.0
        %1211 = vmatpush1.msra.mxu0 0.0
        %1212 = vmatprep.subr.mxu0 0.0
        %1213 = vmatpush1.msra.mxu0 0.0
        %1214 = vmatprep.subr.mxu0 0.0
        %1215 = vmatpush1.msra.mxu0 0.0
        %1216 = vmatprep.subr.mxu0 0.0
        %1217 = vmatpush1.msra.mxu0 0.0
        %1218 = vmatprep.subr.mxu0 0.0
        %v1219 = vand.u32 %v268, 4294901760
        %v1220 = vsub.f32 %v268, %v1219
        %v1221 = vand.u32 %v1220, 4294901760
        %1222 = vmatpush1.msra.mxu0 %v1221
        %1223 = vmatprep.subr.mxu0 0.0
        %v1224 = vand.u32 %v267, 4294901760
        %v1225 = vsub.f32 %v267, %v1224
        %v1226 = vand.u32 %v1225, 4294901760
        %1227 = vmatpush1.msra.mxu0 %v1226
        %1228 = vmatprep.subr.mxu0 0.0
        %1229 = vmatpush2.msra.mxu0 0.0
        %1230 = vmatprep.subr.mxu0 0.0
        %1231 = vmatpush2.msra.mxu0 0.0
        %1232 = vmatprep.subr.mxu0 0.0
        %1233 = vmatpush2.msra.mxu0 0.0
        %1234 = vmatprep.subr.mxu0 0.0
        %1235 = vmatpush2.msra.mxu0 0.0
        %1236 = vmatprep.subr.mxu0 0.0
        %1237 = vmatpush2.msra.mxu0 0.0
        %1238 = vmatprep.subr.mxu0 0.0
        %1239 = vmatpush2.msra.mxu0 0.0
        %1240 = vmatprep.subr.mxu0 0.0
        %1241 = vmatpush2.msra.mxu0 0.0
        %1242 = vmatprep.subr.mxu0 0.0
        %1243 = vmatpush2.msra.mxu0 0.0
        %1244 = vmatprep.subr.mxu0 0.0
        %1245 = vmatpush2.msra.mxu0 0.0
        %1246 = vmatprep.subr.mxu0 0.0
        %1247 = vmatpush2.msra.mxu0 0.0
        %1248 = vmatprep.subr.mxu0 0.0
        %1249 = vmatpush2.msra.mxu0 0.0
        %1250 = vmatprep.subr.mxu0 0.0
        %1251 = vmatpush2.msra.mxu0 0.0
        %1252 = vmatprep.subr.mxu0 0.0
        %1253 = vmatpush2.msra.mxu0 0.0
        %1254 = vmatprep.subr.mxu0 0.0
        %1255 = vmatpush2.msra.mxu0 0.0
        %1256 = vmatprep.subr.mxu0 0.0
        %1257 = vmatpush2.msra.mxu0 0.0
        %1258 = vmatprep.subr.mxu0 0.0
        %1259 = vmatpush2.msra.mxu0 0.0
        %1260 = vmatprep.mubr.f32.mxu0 0.0
        %v1261 = vand.u32 %v879, 4294901760
        %1262 = vmatmul.mubr.f32.gmra.mxu0 %v1261
        %v1263 = vpop.f32.mrf.mxu0
        %v1264 = vadd.f32 %v1187, %v1263
        %v1265 = vpop.f32.mrf.mxu0
        %1266 = vdwg.mxu0
        %1267 = vmatprep.subr.mxu0 0.0
        %1268 = vmatpush1.msra.mxu0 0.0
        %1269 = vmatprep.subr.mxu0 0.0
        %1270 = vmatpush1.msra.mxu0 0.0
        %1271 = vmatprep.subr.mxu0 0.0
        %1272 = vmatpush1.msra.mxu0 0.0
        %1273 = vmatprep.subr.mxu0 0.0
        %1274 = vmatpush1.msra.mxu0 0.0
        %1275 = vmatprep.subr.mxu0 0.0
        %1276 = vmatpush1.msra.mxu0 0.0
        %1277 = vmatprep.subr.mxu0 0.0
        %1278 = vmatpush1.msra.mxu0 0.0
        %1279 = vmatprep.subr.mxu0 0.0
        %1280 = vmatpush1.msra.mxu0 0.0
        %1281 = vmatprep.subr.mxu0 0.0
        %1282 = vmatpush1.msra.mxu0 0.0
        %1283 = vmatprep.subr.mxu0 0.0
        %1284 = vmatpush1.msra.mxu0 0.0
        %1285 = vmatprep.subr.mxu0 0.0
        %1286 = vmatpush1.msra.mxu0 0.0
        %1287 = vmatprep.subr.mxu0 0.0
        %1288 = vmatpush1.msra.mxu0 0.0
        %1289 = vmatprep.subr.mxu0 0.0
        %1290 = vmatpush1.msra.mxu0 0.0
        %1291 = vmatprep.subr.mxu0 0.0
        %1292 = vmatpush1.msra.mxu0 0.0
        %1293 = vmatprep.subr.mxu0 0.0
        %1294 = vmatpush1.msra.mxu0 0.0
        %1295 = vmatprep.subr.mxu0 0.0
        %v1296 = vand.u32 %v268, 4294901760
        %1297 = vmatpush1.msra.mxu0 %v1296
        %1298 = vmatprep.subr.mxu0 0.0
        %v1299 = vand.u32 %v267, 4294901760
        %1300 = vmatpush1.msra.mxu0 %v1299
        %1301 = vmatprep.subr.mxu0 0.0
        %1302 = vmatpush2.msra.mxu0 0.0
        %1303 = vmatprep.subr.mxu0 0.0
        %1304 = vmatpush2.msra.mxu0 0.0
        %1305 = vmatprep.subr.mxu0 0.0
        %1306 = vmatpush2.msra.mxu0 0.0
        %1307 = vmatprep.subr.mxu0 0.0
        %1308 = vmatpush2.msra.mxu0 0.0
        %1309 = vmatprep.subr.mxu0 0.0
        %1310 = vmatpush2.msra.mxu0 0.0
        %1311 = vmatprep.subr.mxu0 0.0
        %1312 = vmatpush2.msra.mxu0 0.0
        %1313 = vmatprep.subr.mxu0 0.0
        %1314 = vmatpush2.msra.mxu0 0.0
        %1315 = vmatprep.subr.mxu0 0.0
        %1316 = vmatpush2.msra.mxu0 0.0
        %1317 = vmatprep.subr.mxu0 0.0
        %1318 = vmatpush2.msra.mxu0 0.0
        %1319 = vmatprep.subr.mxu0 0.0
        %1320 = vmatpush2.msra.mxu0 0.0
        %1321 = vmatprep.subr.mxu0 0.0
        %1322 = vmatpush2.msra.mxu0 0.0
        %1323 = vmatprep.subr.mxu0 0.0
        %1324 = vmatpush2.msra.mxu0 0.0
        %1325 = vmatprep.subr.mxu0 0.0
        %1326 = vmatpush2.msra.mxu0 0.0
        %1327 = vmatprep.subr.mxu0 0.0
        %1328 = vmatpush2.msra.mxu0 0.0
        %1329 = vmatprep.subr.mxu0 0.0
        %1330 = vmatpush2.msra.mxu0 0.0
        %1331 = vmatprep.subr.mxu0 0.0
        %1332 = vmatpush2.msra.mxu0 0.0
        %1333 = vmatprep.mubr.f32.mxu0 0.0
        %v1334 = vand.u32 %v879, 4294901760
        %1335 = vmatmul.mubr.f32.gmra.mxu0 %v1334
        %v1336 = vpop.f32.mrf.mxu0
        %v1337 = vadd.f32 %v1264, %v1336
        %v1338 = vpop.f32.mrf.mxu0
        %1339 = vdwg.mxu0
        %v1341 = vsel %vm781, %v801, 0
        %v1344 = vsel %vm781, %v803, 0
        %1346 = vmatprep.subr.mxu0 0.0
        %1347 = vmatpush1.msra.mxu0 0.0
        %1348 = vmatprep.subr.mxu0 0.0
        %1349 = vmatpush1.msra.mxu0 0.0
        %1350 = vmatprep.subr.mxu0 0.0
        %1351 = vmatpush1.msra.mxu0 0.0
        %1352 = vmatprep.subr.mxu0 0.0
        %1353 = vmatpush1.msra.mxu0 0.0
        %1354 = vmatprep.subr.mxu0 0.0
        %1355 = vmatpush1.msra.mxu0 0.0
        %1356 = vmatprep.subr.mxu0 0.0
        %1357 = vmatpush1.msra.mxu0 0.0
        %1358 = vmatprep.subr.mxu0 0.0
        %1359 = vmatpush1.msra.mxu0 0.0
        %1360 = vmatprep.subr.mxu0 0.0
        %1361 = vmatpush1.msra.mxu0 0.0
        %1362 = vmatprep.subr.mxu0 0.0
        %1363 = vmatpush1.msra.mxu0 0.0
        %1364 = vmatprep.subr.mxu0 0.0
        %1365 = vmatpush1.msra.mxu0 0.0
        %1366 = vmatprep.subr.mxu0 0.0
        %1367 = vmatpush1.msra.mxu0 0.0
        %1368 = vmatprep.subr.mxu0 0.0
        %1369 = vmatpush1.msra.mxu0 0.0
        %1370 = vmatprep.subr.mxu0 0.0
        %1371 = vmatpush1.msra.mxu0 0.0
        %1372 = vmatprep.subr.mxu0 0.0
        %1373 = vmatpush1.msra.mxu0 0.0
        %1374 = vmatprep.subr.mxu0 0.0
        %1375 = vmatpush1.msra.mxu0 0.0
        %1376 = vmatprep.subr.mxu0 0.0
        %v1377 = vand.u32 %v269, 4294901760
        %1378 = vmatpush1.msra.mxu0 %v1377
        %1379 = vmatprep.subr.mxu0 0.0
        %1380 = vmatpush2.msra.mxu0 0.0
        %1381 = vmatprep.subr.mxu0 0.0
        %1382 = vmatpush2.msra.mxu0 0.0
        %1383 = vmatprep.subr.mxu0 0.0
        %1384 = vmatpush2.msra.mxu0 0.0
        %1385 = vmatprep.subr.mxu0 0.0
        %1386 = vmatpush2.msra.mxu0 0.0
        %1387 = vmatprep.subr.mxu0 0.0
        %1388 = vmatpush2.msra.mxu0 0.0
        %1389 = vmatprep.subr.mxu0 0.0
        %1390 = vmatpush2.msra.mxu0 0.0
        %1391 = vmatprep.subr.mxu0 0.0
        %1392 = vmatpush2.msra.mxu0 0.0
        %1393 = vmatprep.subr.mxu0 0.0
        %1394 = vmatpush2.msra.mxu0 0.0
        %1395 = vmatprep.subr.mxu0 0.0
        %1396 = vmatpush2.msra.mxu0 0.0
        %1397 = vmatprep.subr.mxu0 0.0
        %1398 = vmatpush2.msra.mxu0 0.0
        %1399 = vmatprep.subr.mxu0 0.0
        %1400 = vmatpush2.msra.mxu0 0.0
        %1401 = vmatprep.subr.mxu0 0.0
        %1402 = vmatpush2.msra.mxu0 0.0
        %1403 = vmatprep.subr.mxu0 0.0
        %1404 = vmatpush2.msra.mxu0 0.0
        %1405 = vmatprep.subr.mxu0 0.0
        %1406 = vmatpush2.msra.mxu0 0.0
        %1407 = vmatprep.subr.mxu0 0.0
        %1408 = vmatpush2.msra.mxu0 0.0
        %1409 = vmatprep.subr.mxu0 0.0
        %1410 = vmatpush2.msra.mxu0 0.0
        %1411 = vmatprep.mubr.f32.mxu0 0.0
        %v1412 = vand.u32 %v1341, 4294901760
        %v1413 = vsub.f32 %v1341, %v1412
        %v1414 = vand.u32 %v1413, 4294901760
        %v1415 = vsub.f32 %v1413, %v1414
        %v1416 = vand.u32 %v1415, 4294901760
        %1417 = vmatmul.mubr.f32.gmra.mxu0 %v1416
        %v1418 = vpop.f32.mrf.mxu0
        %v1419 = vadd.f32 0.0, %v1418
        %v1420 = vpop.f32.mrf.mxu0
        %1421 = vmatprep.mubr.f32.mxu0 0.0
        %v1422 = vand.u32 %v1344, 4294901760
        %v1423 = vsub.f32 %v1344, %v1422
        %v1424 = vand.u32 %v1423, 4294901760
        %v1425 = vsub.f32 %v1423, %v1424
        %v1426 = vand.u32 %v1425, 4294901760
        %1427 = vmatmul.mubr.f32.gmra.mxu0 %v1426
        %v1428 = vpop.f32.mrf.mxu0
        %v1429 = vadd.f32 0.0, %v1428
        %v1430 = vpop.f32.mrf.mxu0
        %1431 = vdwg.mxu0
        %1432 = vmatprep.subr.mxu0 0.0
        %1433 = vmatpush1.msra.mxu0 0.0
        %1434 = vmatprep.subr.mxu0 0.0
        %1435 = vmatpush1.msra.mxu0 0.0
        %1436 = vmatprep.subr.mxu0 0.0
        %1437 = vmatpush1.msra.mxu0 0.0
        %1438 = vmatprep.subr.mxu0 0.0
        %1439 = vmatpush1.msra.mxu0 0.0
        %1440 = vmatprep.subr.mxu0 0.0
        %1441 = vmatpush1.msra.mxu0 0.0
        %1442 = vmatprep.subr.mxu0 0.0
        %1443 = vmatpush1.msra.mxu0 0.0
        %1444 = vmatprep.subr.mxu0 0.0
        %1445 = vmatpush1.msra.mxu0 0.0
        %1446 = vmatprep.subr.mxu0 0.0
        %1447 = vmatpush1.msra.mxu0 0.0
        %1448 = vmatprep.subr.mxu0 0.0
        %1449 = vmatpush1.msra.mxu0 0.0
        %1450 = vmatprep.subr.mxu0 0.0
        %1451 = vmatpush1.msra.mxu0 0.0
        %1452 = vmatprep.subr.mxu0 0.0
        %1453 = vmatpush1.msra.mxu0 0.0
        %1454 = vmatprep.subr.mxu0 0.0
        %1455 = vmatpush1.msra.mxu0 0.0
        %1456 = vmatprep.subr.mxu0 0.0
        %1457 = vmatpush1.msra.mxu0 0.0
        %1458 = vmatprep.subr.mxu0 0.0
        %1459 = vmatpush1.msra.mxu0 0.0
        %1460 = vmatprep.subr.mxu0 0.0
        %1461 = vmatpush1.msra.mxu0 0.0
        %1462 = vmatprep.subr.mxu0 0.0
        %v1463 = vand.u32 %v269, 4294901760
        %v1464 = vsub.f32 %v269, %v1463
        %v1465 = vand.u32 %v1464, 4294901760
        %v1466 = vsub.f32 %v1464, %v1465
        %v1467 = vand.u32 %v1466, 4294901760
        %1468 = vmatpush1.msra.mxu0 %v1467
        %1469 = vmatprep.subr.mxu0 0.0
        %1470 = vmatpush2.msra.mxu0 0.0
        %1471 = vmatprep.subr.mxu0 0.0
        %1472 = vmatpush2.msra.mxu0 0.0
        %1473 = vmatprep.subr.mxu0 0.0
        %1474 = vmatpush2.msra.mxu0 0.0
        %1475 = vmatprep.subr.mxu0 0.0
        %1476 = vmatpush2.msra.mxu0 0.0
        %1477 = vmatprep.subr.mxu0 0.0
        %1478 = vmatpush2.msra.mxu0 0.0
        %1479 = vmatprep.subr.mxu0 0.0
        %1480 = vmatpush2.msra.mxu0 0.0
        %1481 = vmatprep.subr.mxu0 0.0
        %1482 = vmatpush2.msra.mxu0 0.0
        %1483 = vmatprep.subr.mxu0 0.0
        %1484 = vmatpush2.msra.mxu0 0.0
        %1485 = vmatprep.subr.mxu0 0.0
        %1486 = vmatpush2.msra.mxu0 0.0
        %1487 = vmatprep.subr.mxu0 0.0
        %1488 = vmatpush2.msra.mxu0 0.0
        %1489 = vmatprep.subr.mxu0 0.0
        %1490 = vmatpush2.msra.mxu0 0.0
        %1491 = vmatprep.subr.mxu0 0.0
        %1492 = vmatpush2.msra.mxu0 0.0
        %1493 = vmatprep.subr.mxu0 0.0
        %1494 = vmatpush2.msra.mxu0 0.0
        %1495 = vmatprep.subr.mxu0 0.0
        %1496 = vmatpush2.msra.mxu0 0.0
        %1497 = vmatprep.subr.mxu0 0.0
        %1498 = vmatpush2.msra.mxu0 0.0
        %1499 = vmatprep.subr.mxu0 0.0
        %1500 = vmatpush2.msra.mxu0 0.0
        %1501 = vmatprep.mubr.f32.mxu0 0.0
        %v1502 = vand.u32 %v1341, 4294901760
        %1503 = vmatmul.mubr.f32.gmra.mxu0 %v1502
        %v1504 = vpop.f32.mrf.mxu0
        %v1505 = vadd.f32 %v1419, %v1504
        %v1506 = vpop.f32.mrf.mxu0
        %1507 = vmatprep.mubr.f32.mxu0 0.0
        %v1508 = vand.u32 %v1344, 4294901760
        %1509 = vmatmul.mubr.f32.gmra.mxu0 %v1508
        %v1510 = vpop.f32.mrf.mxu0
        %v1511 = vadd.f32 %v1429, %v1510
        %v1512 = vpop.f32.mrf.mxu0
        %1513 = vdwg.mxu0
        %1514 = vmatprep.subr.mxu0 0.0
        %1515 = vmatpush1.msra.mxu0 0.0
        %1516 = vmatprep.subr.mxu0 0.0
        %1517 = vmatpush1.msra.mxu0 0.0
        %1518 = vmatprep.subr.mxu0 0.0
        %1519 = vmatpush1.msra.mxu0 0.0
        %1520 = vmatprep.subr.mxu0 0.0
        %1521 = vmatpush1.msra.mxu0 0.0
        %1522 = vmatprep.subr.mxu0 0.0
        %1523 = vmatpush1.msra.mxu0 0.0
        %1524 = vmatprep.subr.mxu0 0.0
        %1525 = vmatpush1.msra.mxu0 0.0
        %1526 = vmatprep.subr.mxu0 0.0
        %1527 = vmatpush1.msra.mxu0 0.0
        %1528 = vmatprep.subr.mxu0 0.0
        %1529 = vmatpush1.msra.mxu0 0.0
        %1530 = vmatprep.subr.mxu0 0.0
        %1531 = vmatpush1.msra.mxu0 0.0
        %1532 = vmatprep.subr.mxu0 0.0
        %1533 = vmatpush1.msra.mxu0 0.0
        %1534 = vmatprep.subr.mxu0 0.0
        %1535 = vmatpush1.msra.mxu0 0.0
        %1536 = vmatprep.subr.mxu0 0.0
        %1537 = vmatpush1.msra.mxu0 0.0
        %1538 = vmatprep.subr.mxu0 0.0
        %1539 = vmatpush1.msra.mxu0 0.0
        %1540 = vmatprep.subr.mxu0 0.0
        %1541 = vmatpush1.msra.mxu0 0.0
        %1542 = vmatprep.subr.mxu0 0.0
        %1543 = vmatpush1.msra.mxu0 0.0
        %1544 = vmatprep.subr.mxu0 0.0
        %v1545 = vand.u32 %v269, 4294901760
        %v1546 = vsub.f32 %v269, %v1545
        %1547 = vmatpush1.msra.mxu0 %v1546
        %1548 = vmatprep.subr.mxu0 0.0
        %1549 = vmatpush2.msra.mxu0 0.0
        %1550 = vmatprep.subr.mxu0 0.0
        %1551 = vmatpush2.msra.mxu0 0.0
        %1552 = vmatprep.subr.mxu0 0.0
        %1553 = vmatpush2.msra.mxu0 0.0
        %1554 = vmatprep.subr.mxu0 0.0
        %1555 = vmatpush2.msra.mxu0 0.0
        %1556 = vmatprep.subr.mxu0 0.0
        %1557 = vmatpush2.msra.mxu0 0.0
        %1558 = vmatprep.subr.mxu0 0.0
        %1559 = vmatpush2.msra.mxu0 0.0
        %1560 = vmatprep.subr.mxu0 0.0
        %1561 = vmatpush2.msra.mxu0 0.0
        %1562 = vmatprep.subr.mxu0 0.0
        %1563 = vmatpush2.msra.mxu0 0.0
        %1564 = vmatprep.subr.mxu0 0.0
        %1565 = vmatpush2.msra.mxu0 0.0
        %1566 = vmatprep.subr.mxu0 0.0
        %1567 = vmatpush2.msra.mxu0 0.0
        %1568 = vmatprep.subr.mxu0 0.0
        %1569 = vmatpush2.msra.mxu0 0.0
        %1570 = vmatprep.subr.mxu0 0.0
        %1571 = vmatpush2.msra.mxu0 0.0
        %1572 = vmatprep.subr.mxu0 0.0
        %1573 = vmatpush2.msra.mxu0 0.0
        %1574 = vmatprep.subr.mxu0 0.0
        %1575 = vmatpush2.msra.mxu0 0.0
        %1576 = vmatprep.subr.mxu0 0.0
        %1577 = vmatpush2.msra.mxu0 0.0
        %1578 = vmatprep.subr.mxu0 0.0
        %1579 = vmatpush2.msra.mxu0 0.0
        %1580 = vmatprep.mubr.f32.mxu0 0.0
        %v1581 = vand.u32 %v1341, 4294901760
        %v1582 = vsub.f32 %v1341, %v1581
        %1583 = vmatmul.mubr.f32.gmra.mxu0 %v1582
        %v1584 = vpop.f32.mrf.mxu0
        %v1585 = vadd.f32 %v1505, %v1584
        %v1586 = vpop.f32.mrf.mxu0
        %1587 = vmatprep.mubr.f32.mxu0 0.0
        %v1588 = vand.u32 %v1344, 4294901760
        %v1589 = vsub.f32 %v1344, %v1588
        %1590 = vmatmul.mubr.f32.gmra.mxu0 %v1589
        %v1591 = vpop.f32.mrf.mxu0
        %v1592 = vadd.f32 %v1511, %v1591
        %v1593 = vpop.f32.mrf.mxu0
        %1594 = vdwg.mxu0
        %1595 = vmatprep.subr.mxu0 0.0
        %1596 = vmatpush1.msra.mxu0 0.0
        %1597 = vmatprep.subr.mxu0 0.0
        %1598 = vmatpush1.msra.mxu0 0.0
        %1599 = vmatprep.subr.mxu0 0.0
        %1600 = vmatpush1.msra.mxu0 0.0
        %1601 = vmatprep.subr.mxu0 0.0
        %1602 = vmatpush1.msra.mxu0 0.0
        %1603 = vmatprep.subr.mxu0 0.0
        %1604 = vmatpush1.msra.mxu0 0.0
        %1605 = vmatprep.subr.mxu0 0.0
        %1606 = vmatpush1.msra.mxu0 0.0
        %1607 = vmatprep.subr.mxu0 0.0
        %1608 = vmatpush1.msra.mxu0 0.0
        %1609 = vmatprep.subr.mxu0 0.0
        %1610 = vmatpush1.msra.mxu0 0.0
        %1611 = vmatprep.subr.mxu0 0.0
        %1612 = vmatpush1.msra.mxu0 0.0
        %1613 = vmatprep.subr.mxu0 0.0
        %1614 = vmatpush1.msra.mxu0 0.0
        %1615 = vmatprep.subr.mxu0 0.0
        %1616 = vmatpush1.msra.mxu0 0.0
        %1617 = vmatprep.subr.mxu0 0.0
        %1618 = vmatpush1.msra.mxu0 0.0
        %1619 = vmatprep.subr.mxu0 0.0
        %1620 = vmatpush1.msra.mxu0 0.0
        %1621 = vmatprep.subr.mxu0 0.0
        %1622 = vmatpush1.msra.mxu0 0.0
        %1623 = vmatprep.subr.mxu0 0.0
        %1624 = vmatpush1.msra.mxu0 0.0
        %1625 = vmatprep.subr.mxu0 0.0
        %v1626 = vand.u32 %v269, 4294901760
        %1627 = vmatpush1.msra.mxu0 %v1626
        %1628 = vmatprep.subr.mxu0 0.0
        %1629 = vmatpush2.msra.mxu0 0.0
        %1630 = vmatprep.subr.mxu0 0.0
        %1631 = vmatpush2.msra.mxu0 0.0
        %1632 = vmatprep.subr.mxu0 0.0
        %1633 = vmatpush2.msra.mxu0 0.0
        %1634 = vmatprep.subr.mxu0 0.0
        %1635 = vmatpush2.msra.mxu0 0.0
        %1636 = vmatprep.subr.mxu0 0.0
        %1637 = vmatpush2.msra.mxu0 0.0
        %1638 = vmatprep.subr.mxu0 0.0
        %1639 = vmatpush2.msra.mxu0 0.0
        %1640 = vmatprep.subr.mxu0 0.0
        %1641 = vmatpush2.msra.mxu0 0.0
        %1642 = vmatprep.subr.mxu0 0.0
        %1643 = vmatpush2.msra.mxu0 0.0
        %1644 = vmatprep.subr.mxu0 0.0
        %1645 = vmatpush2.msra.mxu0 0.0
        %1646 = vmatprep.subr.mxu0 0.0
        %1647 = vmatpush2.msra.mxu0 0.0
        %1648 = vmatprep.subr.mxu0 0.0
        %1649 = vmatpush2.msra.mxu0 0.0
        %1650 = vmatprep.subr.mxu0 0.0
        %1651 = vmatpush2.msra.mxu0 0.0
        %1652 = vmatprep.subr.mxu0 0.0
        %1653 = vmatpush2.msra.mxu0 0.0
        %1654 = vmatprep.subr.mxu0 0.0
        %1655 = vmatpush2.msra.mxu0 0.0
        %1656 = vmatprep.subr.mxu0 0.0
        %1657 = vmatpush2.msra.mxu0 0.0
        %1658 = vmatprep.subr.mxu0 0.0
        %1659 = vmatpush2.msra.mxu0 0.0
        %1660 = vmatprep.mubr.f32.mxu0 0.0
        %v1661 = vand.u32 %v1341, 4294901760
        %v1662 = vsub.f32 %v1341, %v1661
        %v1663 = vand.u32 %v1662, 4294901760
        %1664 = vmatmul.mubr.f32.gmra.mxu0 %v1663
        %v1665 = vpop.f32.mrf.mxu0
        %v1666 = vadd.f32 %v1585, %v1665
        %v1667 = vpop.f32.mrf.mxu0
        %1668 = vmatprep.mubr.f32.mxu0 0.0
        %v1669 = vand.u32 %v1344, 4294901760
        %v1670 = vsub.f32 %v1344, %v1669
        %v1671 = vand.u32 %v1670, 4294901760
        %1672 = vmatmul.mubr.f32.gmra.mxu0 %v1671
        %v1673 = vpop.f32.mrf.mxu0
        %v1674 = vadd.f32 %v1592, %v1673
        %v1675 = vpop.f32.mrf.mxu0
        %1676 = vdwg.mxu0
        %1677 = vmatprep.subr.mxu0 0.0
        %1678 = vmatpush1.msra.mxu0 0.0
        %1679 = vmatprep.subr.mxu0 0.0
        %1680 = vmatpush1.msra.mxu0 0.0
        %1681 = vmatprep.subr.mxu0 0.0
        %1682 = vmatpush1.msra.mxu0 0.0
        %1683 = vmatprep.subr.mxu0 0.0
        %1684 = vmatpush1.msra.mxu0 0.0
        %1685 = vmatprep.subr.mxu0 0.0
        %1686 = vmatpush1.msra.mxu0 0.0
        %1687 = vmatprep.subr.mxu0 0.0
        %1688 = vmatpush1.msra.mxu0 0.0
        %1689 = vmatprep.subr.mxu0 0.0
        %1690 = vmatpush1.msra.mxu0 0.0
        %1691 = vmatprep.subr.mxu0 0.0
        %1692 = vmatpush1.msra.mxu0 0.0
        %1693 = vmatprep.subr.mxu0 0.0
        %1694 = vmatpush1.msra.mxu0 0.0
        %1695 = vmatprep.subr.mxu0 0.0
        %1696 = vmatpush1.msra.mxu0 0.0
        %1697 = vmatprep.subr.mxu0 0.0
        %1698 = vmatpush1.msra.mxu0 0.0
        %1699 = vmatprep.subr.mxu0 0.0
        %1700 = vmatpush1.msra.mxu0 0.0
        %1701 = vmatprep.subr.mxu0 0.0
        %1702 = vmatpush1.msra.mxu0 0.0
        %1703 = vmatprep.subr.mxu0 0.0
        %1704 = vmatpush1.msra.mxu0 0.0
        %1705 = vmatprep.subr.mxu0 0.0
        %1706 = vmatpush1.msra.mxu0 0.0
        %1707 = vmatprep.subr.mxu0 0.0
        %v1708 = vand.u32 %v269, 4294901760
        %v1709 = vsub.f32 %v269, %v1708
        %v1710 = vand.u32 %v1709, 4294901760
        %1711 = vmatpush1.msra.mxu0 %v1710
        %1712 = vmatprep.subr.mxu0 0.0
        %1713 = vmatpush2.msra.mxu0 0.0
        %1714 = vmatprep.subr.mxu0 0.0
        %1715 = vmatpush2.msra.mxu0 0.0
        %1716 = vmatprep.subr.mxu0 0.0
        %1717 = vmatpush2.msra.mxu0 0.0
        %1718 = vmatprep.subr.mxu0 0.0
        %1719 = vmatpush2.msra.mxu0 0.0
        %1720 = vmatprep.subr.mxu0 0.0
        %1721 = vmatpush2.msra.mxu0 0.0
        %1722 = vmatprep.subr.mxu0 0.0
        %1723 = vmatpush2.msra.mxu0 0.0
        %1724 = vmatprep.subr.mxu0 0.0
        %1725 = vmatpush2.msra.mxu0 0.0
        %1726 = vmatprep.subr.mxu0 0.0
        %1727 = vmatpush2.msra.mxu0 0.0
        %1728 = vmatprep.subr.mxu0 0.0
        %1729 = vmatpush2.msra.mxu0 0.0
        %1730 = vmatprep.subr.mxu0 0.0
        %1731 = vmatpush2.msra.mxu0 0.0
        %1732 = vmatprep.subr.mxu0 0.0
        %1733 = vmatpush2.msra.mxu0 0.0
        %1734 = vmatprep.subr.mxu0 0.0
        %1735 = vmatpush2.msra.mxu0 0.0
        %1736 = vmatprep.subr.mxu0 0.0
        %1737 = vmatpush2.msra.mxu0 0.0
        %1738 = vmatprep.subr.mxu0 0.0
        %1739 = vmatpush2.msra.mxu0 0.0
        %1740 = vmatprep.subr.mxu0 0.0
        %1741 = vmatpush2.msra.mxu0 0.0
        %1742 = vmatprep.subr.mxu0 0.0
        %1743 = vmatpush2.msra.mxu0 0.0
        %1744 = vmatprep.mubr.f32.mxu0 0.0
        %v1745 = vand.u32 %v1341, 4294901760
        %1746 = vmatmul.mubr.f32.gmra.mxu0 %v1745
        %v1747 = vpop.f32.mrf.mxu0
        %v1748 = vadd.f32 %v1666, %v1747
        %v1749 = vpop.f32.mrf.mxu0
        %1750 = vmatprep.mubr.f32.mxu0 0.0
        %v1751 = vand.u32 %v1344, 4294901760
        %1752 = vmatmul.mubr.f32.gmra.mxu0 %v1751
        %v1753 = vpop.f32.mrf.mxu0
        %v1754 = vadd.f32 %v1674, %v1753
        %v1755 = vpop.f32.mrf.mxu0
        %1756 = vdwg.mxu0
        %1757 = vmatprep.subr.mxu0 0.0
        %1758 = vmatpush1.msra.mxu0 0.0
        %1759 = vmatprep.subr.mxu0 0.0
        %1760 = vmatpush1.msra.mxu0 0.0
        %1761 = vmatprep.subr.mxu0 0.0
        %1762 = vmatpush1.msra.mxu0 0.0
        %1763 = vmatprep.subr.mxu0 0.0
        %1764 = vmatpush1.msra.mxu0 0.0
        %1765 = vmatprep.subr.mxu0 0.0
        %1766 = vmatpush1.msra.mxu0 0.0
        %1767 = vmatprep.subr.mxu0 0.0
        %1768 = vmatpush1.msra.mxu0 0.0
        %1769 = vmatprep.subr.mxu0 0.0
        %1770 = vmatpush1.msra.mxu0 0.0
        %1771 = vmatprep.subr.mxu0 0.0
        %1772 = vmatpush1.msra.mxu0 0.0
        %1773 = vmatprep.subr.mxu0 0.0
        %1774 = vmatpush1.msra.mxu0 0.0
        %1775 = vmatprep.subr.mxu0 0.0
        %1776 = vmatpush1.msra.mxu0 0.0
        %1777 = vmatprep.subr.mxu0 0.0
        %1778 = vmatpush1.msra.mxu0 0.0
        %1779 = vmatprep.subr.mxu0 0.0
        %1780 = vmatpush1.msra.mxu0 0.0
        %1781 = vmatprep.subr.mxu0 0.0
        %1782 = vmatpush1.msra.mxu0 0.0
        %1783 = vmatprep.subr.mxu0 0.0
        %1784 = vmatpush1.msra.mxu0 0.0
        %1785 = vmatprep.subr.mxu0 0.0
        %1786 = vmatpush1.msra.mxu0 0.0
        %1787 = vmatprep.subr.mxu0 0.0
        %v1788 = vand.u32 %v269, 4294901760
        %1789 = vmatpush1.msra.mxu0 %v1788
        %1790 = vmatprep.subr.mxu0 0.0
        %1791 = vmatpush2.msra.mxu0 0.0
        %1792 = vmatprep.subr.mxu0 0.0
        %1793 = vmatpush2.msra.mxu0 0.0
        %1794 = vmatprep.subr.mxu0 0.0
        %1795 = vmatpush2.msra.mxu0 0.0
        %1796 = vmatprep.subr.mxu0 0.0
        %1797 = vmatpush2.msra.mxu0 0.0
        %1798 = vmatprep.subr.mxu0 0.0
        %1799 = vmatpush2.msra.mxu0 0.0
        %1800 = vmatprep.subr.mxu0 0.0
        %1801 = vmatpush2.msra.mxu0 0.0
        %1802 = vmatprep.subr.mxu0 0.0
        %1803 = vmatpush2.msra.mxu0 0.0
        %1804 = vmatprep.subr.mxu0 0.0
        %1805 = vmatpush2.msra.mxu0 0.0
        %1806 = vmatprep.subr.mxu0 0.0
        %1807 = vmatpush2.msra.mxu0 0.0
        %1808 = vmatprep.subr.mxu0 0.0
        %1809 = vmatpush2.msra.mxu0 0.0
        %1810 = vmatprep.subr.mxu0 0.0
        %1811 = vmatpush2.msra.mxu0 0.0
        %1812 = vmatprep.subr.mxu0 0.0
        %1813 = vmatpush2.msra.mxu0 0.0
        %1814 = vmatprep.subr.mxu0 0.0
        %1815 = vmatpush2.msra.mxu0 0.0
        %1816 = vmatprep.subr.mxu0 0.0
        %1817 = vmatpush2.msra.mxu0 0.0
        %1818 = vmatprep.subr.mxu0 0.0
        %1819 = vmatpush2.msra.mxu0 0.0
        %1820 = vmatprep.subr.mxu0 0.0
        %1821 = vmatpush2.msra.mxu0 0.0
        %1822 = vmatprep.mubr.f32.mxu0 0.0
        %v1823 = vand.u32 %v1341, 4294901760
        %1824 = vmatmul.mubr.f32.gmra.mxu0 %v1823
        %v1825 = vpop.f32.mrf.mxu0
        %v1826 = vadd.f32 %v1748, %v1825
        %v1827 = vpop.f32.mrf.mxu0
        %1828 = vmatprep.mubr.f32.mxu0 0.0
        %v1829 = vand.u32 %v1344, 4294901760
        %1830 = vmatmul.mubr.f32.gmra.mxu0 %v1829
        %v1831 = vpop.f32.mrf.mxu0
        %v1832 = vadd.f32 %v1754, %v1831
        %v1833 = vpop.f32.mrf.mxu0
        %1834 = vdwg.mxu0
        %1835 = vmatprep.subr.mxu0 0.0
        %1836 = vmatpush1.msra.mxu0 0.0
        %1837 = vmatprep.subr.mxu0 0.0
        %1838 = vmatpush1.msra.mxu0 0.0
        %1839 = vmatprep.subr.mxu0 0.0
        %1840 = vmatpush1.msra.mxu0 0.0
        %1841 = vmatprep.subr.mxu0 0.0
        %1842 = vmatpush1.msra.mxu0 0.0
        %1843 = vmatprep.subr.mxu0 0.0
        %1844 = vmatpush1.msra.mxu0 0.0
        %1845 = vmatprep.subr.mxu0 0.0
        %1846 = vmatpush1.msra.mxu0 0.0
        %1847 = vmatprep.subr.mxu0 0.0
        %1848 = vmatpush1.msra.mxu0 0.0
        %1849 = vmatprep.subr.mxu0 0.0
        %1850 = vmatpush1.msra.mxu0 0.0
        %1851 = vmatprep.subr.mxu0 0.0
        %1852 = vmatpush1.msra.mxu0 0.0
        %1853 = vmatprep.subr.mxu0 0.0
        %1854 = vmatpush1.msra.mxu0 0.0
        %1855 = vmatprep.subr.mxu0 0.0
        %1856 = vmatpush1.msra.mxu0 0.0
        %1857 = vmatprep.subr.mxu0 0.0
        %1858 = vmatpush1.msra.mxu0 0.0
        %1859 = vmatprep.subr.mxu0 0.0
        %1860 = vmatpush1.msra.mxu0 0.0
        %1861 = vmatprep.subr.mxu0 0.0
        %1862 = vmatpush1.msra.mxu0 0.0
        %1863 = vmatprep.subr.mxu0 0.0
        %1864 = vmatpush1.msra.mxu0 0.0
        %1865 = vmatprep.subr.mxu0 0.0
        %v1866 = vand.u32 %v1337, 4294901760
        %1867 = vmatpush1.msra.mxu0 %v1866
        %1868 = vmatprep.subr.mxu0 0.0
        %1869 = vmatpush2.msra.mxu0 0.0
        %1870 = vmatprep.subr.mxu0 0.0
        %1871 = vmatpush2.msra.mxu0 0.0
        %1872 = vmatprep.subr.mxu0 0.0
        %1873 = vmatpush2.msra.mxu0 0.0
        %1874 = vmatprep.subr.mxu0 0.0
        %1875 = vmatpush2.msra.mxu0 0.0
        %1876 = vmatprep.subr.mxu0 0.0
        %1877 = vmatpush2.msra.mxu0 0.0
        %1878 = vmatprep.subr.mxu0 0.0
        %1879 = vmatpush2.msra.mxu0 0.0
        %1880 = vmatprep.subr.mxu0 0.0
        %1881 = vmatpush2.msra.mxu0 0.0
        %1882 = vmatprep.subr.mxu0 0.0
        %1883 = vmatpush2.msra.mxu0 0.0
        %1884 = vmatprep.subr.mxu0 0.0
        %1885 = vmatpush2.msra.mxu0 0.0
        %1886 = vmatprep.subr.mxu0 0.0
        %1887 = vmatpush2.msra.mxu0 0.0
        %1888 = vmatprep.subr.mxu0 0.0
        %1889 = vmatpush2.msra.mxu0 0.0
        %1890 = vmatprep.subr.mxu0 0.0
        %1891 = vmatpush2.msra.mxu0 0.0
        %1892 = vmatprep.subr.mxu0 0.0
        %1893 = vmatpush2.msra.mxu0 0.0
        %1894 = vmatprep.subr.mxu0 0.0
        %1895 = vmatpush2.msra.mxu0 0.0
        %1896 = vmatprep.subr.mxu0 0.0
        %1897 = vmatpush2.msra.mxu0 0.0
        %1898 = vmatprep.subr.mxu0 0.0
        %1899 = vmatpush2.msra.mxu0 0.0
        %1900 = vmatprep.mubr.f32.mxu0 0.0
        %v1901 = vand.u32 %v1341, 4294901760
        %v1902 = vsub.f32 %v1341, %v1901
        %v1903 = vand.u32 %v1902, 4294901760
        %v1904 = vsub.f32 %v1902, %v1903
        %v1905 = vand.u32 %v1904, 4294901760
        %1906 = vmatmul.mubr.f32.gmra.mxu0 %v1905
        %v1907 = vpop.f32.mrf.mxu0
        %v1908 = vadd.f32 0.0, %v1907
        %v1909 = vpop.f32.mrf.mxu0
        %1910 = vmatprep.mubr.f32.mxu0 0.0
        %v1911 = vand.u32 %v1344, 4294901760
        %v1912 = vsub.f32 %v1344, %v1911
        %v1913 = vand.u32 %v1912, 4294901760
        %v1914 = vsub.f32 %v1912, %v1913
        %v1915 = vand.u32 %v1914, 4294901760
        %1916 = vmatmul.mubr.f32.gmra.mxu0 %v1915
        %v1917 = vpop.f32.mrf.mxu0
        %v1918 = vadd.f32 0.0, %v1917
        %v1919 = vpop.f32.mrf.mxu0
        %1920 = vdwg.mxu0
        %1921 = vmatprep.subr.mxu0 0.0
        %1922 = vmatpush1.msra.mxu0 0.0
        %1923 = vmatprep.subr.mxu0 0.0
        %1924 = vmatpush1.msra.mxu0 0.0
        %1925 = vmatprep.subr.mxu0 0.0
        %1926 = vmatpush1.msra.mxu0 0.0
        %1927 = vmatprep.subr.mxu0 0.0
        %1928 = vmatpush1.msra.mxu0 0.0
        %1929 = vmatprep.subr.mxu0 0.0
        %1930 = vmatpush1.msra.mxu0 0.0
        %1931 = vmatprep.subr.mxu0 0.0
        %1932 = vmatpush1.msra.mxu0 0.0
        %1933 = vmatprep.subr.mxu0 0.0
        %1934 = vmatpush1.msra.mxu0 0.0
        %1935 = vmatprep.subr.mxu0 0.0
        %1936 = vmatpush1.msra.mxu0 0.0
        %1937 = vmatprep.subr.mxu0 0.0
        %1938 = vmatpush1.msra.mxu0 0.0
        %1939 = vmatprep.subr.mxu0 0.0
        %1940 = vmatpush1.msra.mxu0 0.0
        %1941 = vmatprep.subr.mxu0 0.0
        %1942 = vmatpush1.msra.mxu0 0.0
        %1943 = vmatprep.subr.mxu0 0.0
        %1944 = vmatpush1.msra.mxu0 0.0
        %1945 = vmatprep.subr.mxu0 0.0
        %1946 = vmatpush1.msra.mxu0 0.0
        %1947 = vmatprep.subr.mxu0 0.0
        %1948 = vmatpush1.msra.mxu0 0.0
        %1949 = vmatprep.subr.mxu0 0.0
        %1950 = vmatpush1.msra.mxu0 0.0
        %1951 = vmatprep.subr.mxu0 0.0
        %v1952 = vand.u32 %v1337, 4294901760
        %v1953 = vsub.f32 %v1337, %v1952
        %v1954 = vand.u32 %v1953, 4294901760
        %v1955 = vsub.f32 %v1953, %v1954
        %v1956 = vand.u32 %v1955, 4294901760
        %1957 = vmatpush1.msra.mxu0 %v1956
        %1958 = vmatprep.subr.mxu0 0.0
        %1959 = vmatpush2.msra.mxu0 0.0
        %1960 = vmatprep.subr.mxu0 0.0
        %1961 = vmatpush2.msra.mxu0 0.0
        %1962 = vmatprep.subr.mxu0 0.0
        %1963 = vmatpush2.msra.mxu0 0.0
        %1964 = vmatprep.subr.mxu0 0.0
        %1965 = vmatpush2.msra.mxu0 0.0
        %1966 = vmatprep.subr.mxu0 0.0
        %1967 = vmatpush2.msra.mxu0 0.0
        %1968 = vmatprep.subr.mxu0 0.0
        %1969 = vmatpush2.msra.mxu0 0.0
        %1970 = vmatprep.subr.mxu0 0.0
        %1971 = vmatpush2.msra.mxu0 0.0
        %1972 = vmatprep.subr.mxu0 0.0
        %1973 = vmatpush2.msra.mxu0 0.0
        %1974 = vmatprep.subr.mxu0 0.0
        %1975 = vmatpush2.msra.mxu0 0.0
        %1976 = vmatprep.subr.mxu0 0.0
        %1977 = vmatpush2.msra.mxu0 0.0
        %1978 = vmatprep.subr.mxu0 0.0
        %1979 = vmatpush2.msra.mxu0 0.0
        %1980 = vmatprep.subr.mxu0 0.0
        %1981 = vmatpush2.msra.mxu0 0.0
        %1982 = vmatprep.subr.mxu0 0.0
        %1983 = vmatpush2.msra.mxu0 0.0
        %1984 = vmatprep.subr.mxu0 0.0
        %1985 = vmatpush2.msra.mxu0 0.0
        %1986 = vmatprep.subr.mxu0 0.0
        %1987 = vmatpush2.msra.mxu0 0.0
        %1988 = vmatprep.subr.mxu0 0.0
        %1989 = vmatpush2.msra.mxu0 0.0
        %1990 = vmatprep.mubr.f32.mxu0 0.0
        %v1991 = vand.u32 %v1341, 4294901760
        %1992 = vmatmul.mubr.f32.gmra.mxu0 %v1991
        %v1993 = vpop.f32.mrf.mxu0
        %v1994 = vadd.f32 %v1908, %v1993
        %v1995 = vpop.f32.mrf.mxu0
        %1996 = vmatprep.mubr.f32.mxu0 0.0
        %v1997 = vand.u32 %v1344, 4294901760
        %1998 = vmatmul.mubr.f32.gmra.mxu0 %v1997
        %v1999 = vpop.f32.mrf.mxu0
        %v2000 = vadd.f32 %v1918, %v1999
        %v2001 = vpop.f32.mrf.mxu0
        %2002 = vdwg.mxu0
        %2003 = vmatprep.subr.mxu0 0.0
        %2004 = vmatpush1.msra.mxu0 0.0
        %2005 = vmatprep.subr.mxu0 0.0
        %2006 = vmatpush1.msra.mxu0 0.0
        %2007 = vmatprep.subr.mxu0 0.0
        %2008 = vmatpush1.msra.mxu0 0.0
        %2009 = vmatprep.subr.mxu0 0.0
        %2010 = vmatpush1.msra.mxu0 0.0
        %2011 = vmatprep.subr.mxu0 0.0
        %2012 = vmatpush1.msra.mxu0 0.0
        %2013 = vmatprep.subr.mxu0 0.0
        %2014 = vmatpush1.msra.mxu0 0.0
        %2015 = vmatprep.subr.mxu0 0.0
        %2016 = vmatpush1.msra.mxu0 0.0
        %2017 = vmatprep.subr.mxu0 0.0
        %2018 = vmatpush1.msra.mxu0 0.0
        %2019 = vmatprep.subr.mxu0 0.0
        %2020 = vmatpush1.msra.mxu0 0.0
        %2021 = vmatprep.subr.mxu0 0.0
        %2022 = vmatpush1.msra.mxu0 0.0
        %2023 = vmatprep.subr.mxu0 0.0
        %2024 = vmatpush1.msra.mxu0 0.0
        %2025 = vmatprep.subr.mxu0 0.0
        %2026 = vmatpush1.msra.mxu0 0.0
        %2027 = vmatprep.subr.mxu0 0.0
        %2028 = vmatpush1.msra.mxu0 0.0
        %2029 = vmatprep.subr.mxu0 0.0
        %2030 = vmatpush1.msra.mxu0 0.0
        %2031 = vmatprep.subr.mxu0 0.0
        %2032 = vmatpush1.msra.mxu0 0.0
        %2033 = vmatprep.subr.mxu0 0.0
        %v2034 = vand.u32 %v1337, 4294901760
        %v2035 = vsub.f32 %v1337, %v2034
        %2036 = vmatpush1.msra.mxu0 %v2035
        %2037 = vmatprep.subr.mxu0 0.0
        %2038 = vmatpush2.msra.mxu0 0.0
        %2039 = vmatprep.subr.mxu0 0.0
        %2040 = vmatpush2.msra.mxu0 0.0
        %2041 = vmatprep.subr.mxu0 0.0
        %2042 = vmatpush2.msra.mxu0 0.0
        %2043 = vmatprep.subr.mxu0 0.0
        %2044 = vmatpush2.msra.mxu0 0.0
        %2045 = vmatprep.subr.mxu0 0.0
        %2046 = vmatpush2.msra.mxu0 0.0
        %2047 = vmatprep.subr.mxu0 0.0
        %2048 = vmatpush2.msra.mxu0 0.0
        %2049 = vmatprep.subr.mxu0 0.0
        %2050 = vmatpush2.msra.mxu0 0.0
        %2051 = vmatprep.subr.mxu0 0.0
        %2052 = vmatpush2.msra.mxu0 0.0
        %2053 = vmatprep.subr.mxu0 0.0
        %2054 = vmatpush2.msra.mxu0 0.0
        %2055 = vmatprep.subr.mxu0 0.0
        %2056 = vmatpush2.msra.mxu0 0.0
        %2057 = vmatprep.subr.mxu0 0.0
        %2058 = vmatpush2.msra.mxu0 0.0
        %2059 = vmatprep.subr.mxu0 0.0
        %2060 = vmatpush2.msra.mxu0 0.0
        %2061 = vmatprep.subr.mxu0 0.0
        %2062 = vmatpush2.msra.mxu0 0.0
        %2063 = vmatprep.subr.mxu0 0.0
        %2064 = vmatpush2.msra.mxu0 0.0
        %2065 = vmatprep.subr.mxu0 0.0
        %2066 = vmatpush2.msra.mxu0 0.0
        %2067 = vmatprep.subr.mxu0 0.0
        %2068 = vmatpush2.msra.mxu0 0.0
        %2069 = vmatprep.mubr.f32.mxu0 0.0
        %v2070 = vand.u32 %v1341, 4294901760
        %v2071 = vsub.f32 %v1341, %v2070
        %2072 = vmatmul.mubr.f32.gmra.mxu0 %v2071
        %v2073 = vpop.f32.mrf.mxu0
        %v2074 = vadd.f32 %v1994, %v2073
        %v2075 = vpop.f32.mrf.mxu0
        %2076 = vmatprep.mubr.f32.mxu0 0.0
        %v2077 = vand.u32 %v1344, 4294901760
        %v2078 = vsub.f32 %v1344, %v2077
        %2079 = vmatmul.mubr.f32.gmra.mxu0 %v2078
        %v2080 = vpop.f32.mrf.mxu0
        %v2081 = vadd.f32 %v2000, %v2080
        %v2082 = vpop.f32.mrf.mxu0
        %2083 = vdwg.mxu0
        %2084 = vmatprep.subr.mxu0 0.0
        %2085 = vmatpush1.msra.mxu0 0.0
        %2086 = vmatprep.subr.mxu0 0.0
        %2087 = vmatpush1.msra.mxu0 0.0
        %2088 = vmatprep.subr.mxu0 0.0
        %2089 = vmatpush1.msra.mxu0 0.0
        %2090 = vmatprep.subr.mxu0 0.0
        %2091 = vmatpush1.msra.mxu0 0.0
        %2092 = vmatprep.subr.mxu0 0.0
        %2093 = vmatpush1.msra.mxu0 0.0
        %2094 = vmatprep.subr.mxu0 0.0
        %2095 = vmatpush1.msra.mxu0 0.0
        %2096 = vmatprep.subr.mxu0 0.0
        %2097 = vmatpush1.msra.mxu0 0.0
        %2098 = vmatprep.subr.mxu0 0.0
        %2099 = vmatpush1.msra.mxu0 0.0
        %2100 = vmatprep.subr.mxu0 0.0
        %2101 = vmatpush1.msra.mxu0 0.0
        %2102 = vmatprep.subr.mxu0 0.0
        %2103 = vmatpush1.msra.mxu0 0.0
        %2104 = vmatprep.subr.mxu0 0.0
        %2105 = vmatpush1.msra.mxu0 0.0
        %2106 = vmatprep.subr.mxu0 0.0
        %2107 = vmatpush1.msra.mxu0 0.0
        %2108 = vmatprep.subr.mxu0 0.0
        %2109 = vmatpush1.msra.mxu0 0.0
        %2110 = vmatprep.subr.mxu0 0.0
        %2111 = vmatpush1.msra.mxu0 0.0
        %2112 = vmatprep.subr.mxu0 0.0
        %2113 = vmatpush1.msra.mxu0 0.0
        %2114 = vmatprep.subr.mxu0 0.0
        %v2115 = vand.u32 %v1337, 4294901760
        %2116 = vmatpush1.msra.mxu0 %v2115
        %2117 = vmatprep.subr.mxu0 0.0
        %2118 = vmatpush2.msra.mxu0 0.0
        %2119 = vmatprep.subr.mxu0 0.0
        %2120 = vmatpush2.msra.mxu0 0.0
        %2121 = vmatprep.subr.mxu0 0.0
        %2122 = vmatpush2.msra.mxu0 0.0
        %2123 = vmatprep.subr.mxu0 0.0
        %2124 = vmatpush2.msra.mxu0 0.0
        %2125 = vmatprep.subr.mxu0 0.0
        %2126 = vmatpush2.msra.mxu0 0.0
        %2127 = vmatprep.subr.mxu0 0.0
        %2128 = vmatpush2.msra.mxu0 0.0
        %2129 = vmatprep.subr.mxu0 0.0
        %2130 = vmatpush2.msra.mxu0 0.0
        %2131 = vmatprep.subr.mxu0 0.0
        %2132 = vmatpush2.msra.mxu0 0.0
        %2133 = vmatprep.subr.mxu0 0.0
        %2134 = vmatpush2.msra.mxu0 0.0
        %2135 = vmatprep.subr.mxu0 0.0
        %2136 = vmatpush2.msra.mxu0 0.0
        %2137 = vmatprep.subr.mxu0 0.0
        %2138 = vmatpush2.msra.mxu0 0.0
        %2139 = vmatprep.subr.mxu0 0.0
        %2140 = vmatpush2.msra.mxu0 0.0
        %2141 = vmatprep.subr.mxu0 0.0
        %2142 = vmatpush2.msra.mxu0 0.0
        %2143 = vmatprep.subr.mxu0 0.0
        %2144 = vmatpush2.msra.mxu0 0.0
        %2145 = vmatprep.subr.mxu0 0.0
        %2146 = vmatpush2.msra.mxu0 0.0
        %2147 = vmatprep.subr.mxu0 0.0
        %2148 = vmatpush2.msra.mxu0 0.0
        %2149 = vmatprep.mubr.f32.mxu0 0.0
        %v2150 = vand.u32 %v1341, 4294901760
        %v2151 = vsub.f32 %v1341, %v2150
        %v2152 = vand.u32 %v2151, 4294901760
        %2153 = vmatmul.mubr.f32.gmra.mxu0 %v2152
        %v2154 = vpop.f32.mrf.mxu0
        %v2155 = vadd.f32 %v2074, %v2154
        %v2156 = vpop.f32.mrf.mxu0
        %2157 = vmatprep.mubr.f32.mxu0 0.0
        %v2158 = vand.u32 %v1344, 4294901760
        %v2159 = vsub.f32 %v1344, %v2158
        %v2160 = vand.u32 %v2159, 4294901760
        %2161 = vmatmul.mubr.f32.gmra.mxu0 %v2160
        %v2162 = vpop.f32.mrf.mxu0
        %v2163 = vadd.f32 %v2081, %v2162
        %v2164 = vpop.f32.mrf.mxu0
        %2165 = vdwg.mxu0
        %2166 = vmatprep.subr.mxu0 0.0
        %2167 = vmatpush1.msra.mxu0 0.0
        %2168 = vmatprep.subr.mxu0 0.0
        %2169 = vmatpush1.msra.mxu0 0.0
        %2170 = vmatprep.subr.mxu0 0.0
        %2171 = vmatpush1.msra.mxu0 0.0
        %2172 = vmatprep.subr.mxu0 0.0
        %2173 = vmatpush1.msra.mxu0 0.0
        %2174 = vmatprep.subr.mxu0 0.0
        %2175 = vmatpush1.msra.mxu0 0.0
        %2176 = vmatprep.subr.mxu0 0.0
        %2177 = vmatpush1.msra.mxu0 0.0
        %2178 = vmatprep.subr.mxu0 0.0
        %2179 = vmatpush1.msra.mxu0 0.0
        %2180 = vmatprep.subr.mxu0 0.0
        %2181 = vmatpush1.msra.mxu0 0.0
        %2182 = vmatprep.subr.mxu0 0.0
        %2183 = vmatpush1.msra.mxu0 0.0
        %2184 = vmatprep.subr.mxu0 0.0
        %2185 = vmatpush1.msra.mxu0 0.0
        %2186 = vmatprep.subr.mxu0 0.0
        %2187 = vmatpush1.msra.mxu0 0.0
        %2188 = vmatprep.subr.mxu0 0.0
        %2189 = vmatpush1.msra.mxu0 0.0
        %2190 = vmatprep.subr.mxu0 0.0
        %2191 = vmatpush1.msra.mxu0 0.0
        %2192 = vmatprep.subr.mxu0 0.0
        %2193 = vmatpush1.msra.mxu0 0.0
        %2194 = vmatprep.subr.mxu0 0.0
        %2195 = vmatpush1.msra.mxu0 0.0
        %2196 = vmatprep.subr.mxu0 0.0
        %v2197 = vand.u32 %v1337, 4294901760
        %v2198 = vsub.f32 %v1337, %v2197
        %v2199 = vand.u32 %v2198, 4294901760
        %2200 = vmatpush1.msra.mxu0 %v2199
        %2201 = vmatprep.subr.mxu0 0.0
        %2202 = vmatpush2.msra.mxu0 0.0
        %2203 = vmatprep.subr.mxu0 0.0
        %2204 = vmatpush2.msra.mxu0 0.0
        %2205 = vmatprep.subr.mxu0 0.0
        %2206 = vmatpush2.msra.mxu0 0.0
        %2207 = vmatprep.subr.mxu0 0.0
        %2208 = vmatpush2.msra.mxu0 0.0
        %2209 = vmatprep.subr.mxu0 0.0
        %2210 = vmatpush2.msra.mxu0 0.0
        %2211 = vmatprep.subr.mxu0 0.0
        %2212 = vmatpush2.msra.mxu0 0.0
        %2213 = vmatprep.subr.mxu0 0.0
        %2214 = vmatpush2.msra.mxu0 0.0
        %2215 = vmatprep.subr.mxu0 0.0
        %2216 = vmatpush2.msra.mxu0 0.0
        %2217 = vmatprep.subr.mxu0 0.0
        %2218 = vmatpush2.msra.mxu0 0.0
        %2219 = vmatprep.subr.mxu0 0.0
        %2220 = vmatpush2.msra.mxu0 0.0
        %2221 = vmatprep.subr.mxu0 0.0
        %2222 = vmatpush2.msra.mxu0 0.0
        %2223 = vmatprep.subr.mxu0 0.0
        %2224 = vmatpush2.msra.mxu0 0.0
        %2225 = vmatprep.subr.mxu0 0.0
        %2226 = vmatpush2.msra.mxu0 0.0
        %2227 = vmatprep.subr.mxu0 0.0
        %2228 = vmatpush2.msra.mxu0 0.0
        %2229 = vmatprep.subr.mxu0 0.0
        %2230 = vmatpush2.msra.mxu0 0.0
        %2231 = vmatprep.subr.mxu0 0.0
        %2232 = vmatpush2.msra.mxu0 0.0
        %2233 = vmatprep.mubr.f32.mxu0 0.0
        %v2234 = vand.u32 %v1341, 4294901760
        %2235 = vmatmul.mubr.f32.gmra.mxu0 %v2234
        %v2236 = vpop.f32.mrf.mxu0
        %v2237 = vadd.f32 %v2155, %v2236
        %v2238 = vpop.f32.mrf.mxu0
        %2239 = vmatprep.mubr.f32.mxu0 0.0
        %v2240 = vand.u32 %v1344, 4294901760
        %2241 = vmatmul.mubr.f32.gmra.mxu0 %v2240
        %v2242 = vpop.f32.mrf.mxu0
        %v2243 = vadd.f32 %v2163, %v2242
        %v2244 = vpop.f32.mrf.mxu0
        %2245 = vdwg.mxu0
        %2246 = vmatprep.subr.mxu0 0.0
        %2247 = vmatpush1.msra.mxu0 0.0
        %2248 = vmatprep.subr.mxu0 0.0
        %2249 = vmatpush1.msra.mxu0 0.0
        %2250 = vmatprep.subr.mxu0 0.0
        %2251 = vmatpush1.msra.mxu0 0.0
        %2252 = vmatprep.subr.mxu0 0.0
        %2253 = vmatpush1.msra.mxu0 0.0
        %2254 = vmatprep.subr.mxu0 0.0
        %2255 = vmatpush1.msra.mxu0 0.0
        %2256 = vmatprep.subr.mxu0 0.0
        %2257 = vmatpush1.msra.mxu0 0.0
        %2258 = vmatprep.subr.mxu0 0.0
        %2259 = vmatpush1.msra.mxu0 0.0
        %2260 = vmatprep.subr.mxu0 0.0
        %2261 = vmatpush1.msra.mxu0 0.0
        %2262 = vmatprep.subr.mxu0 0.0
        %2263 = vmatpush1.msra.mxu0 0.0
        %2264 = vmatprep.subr.mxu0 0.0
        %2265 = vmatpush1.msra.mxu0 0.0
        %2266 = vmatprep.subr.mxu0 0.0
        %2267 = vmatpush1.msra.mxu0 0.0
        %2268 = vmatprep.subr.mxu0 0.0
        %2269 = vmatpush1.msra.mxu0 0.0
        %2270 = vmatprep.subr.mxu0 0.0
        %2271 = vmatpush1.msra.mxu0 0.0
        %2272 = vmatprep.subr.mxu0 0.0
        %2273 = vmatpush1.msra.mxu0 0.0
        %2274 = vmatprep.subr.mxu0 0.0
        %2275 = vmatpush1.msra.mxu0 0.0
        %2276 = vmatprep.subr.mxu0 0.0
        %v2277 = vand.u32 %v1337, 4294901760
        %2278 = vmatpush1.msra.mxu0 %v2277
        %2279 = vmatprep.subr.mxu0 0.0
        %2280 = vmatpush2.msra.mxu0 0.0
        %2281 = vmatprep.subr.mxu0 0.0
        %2282 = vmatpush2.msra.mxu0 0.0
        %2283 = vmatprep.subr.mxu0 0.0
        %2284 = vmatpush2.msra.mxu0 0.0
        %2285 = vmatprep.subr.mxu0 0.0
        %2286 = vmatpush2.msra.mxu0 0.0
        %2287 = vmatprep.subr.mxu0 0.0
        %2288 = vmatpush2.msra.mxu0 0.0
        %2289 = vmatprep.subr.mxu0 0.0
        %2290 = vmatpush2.msra.mxu0 0.0
        %2291 = vmatprep.subr.mxu0 0.0
        %2292 = vmatpush2.msra.mxu0 0.0
        %2293 = vmatprep.subr.mxu0 0.0
        %2294 = vmatpush2.msra.mxu0 0.0
        %2295 = vmatprep.subr.mxu0 0.0
        %2296 = vmatpush2.msra.mxu0 0.0
        %2297 = vmatprep.subr.mxu0 0.0
        %2298 = vmatpush2.msra.mxu0 0.0
        %2299 = vmatprep.subr.mxu0 0.0
        %2300 = vmatpush2.msra.mxu0 0.0
        %2301 = vmatprep.subr.mxu0 0.0
        %2302 = vmatpush2.msra.mxu0 0.0
        %2303 = vmatprep.subr.mxu0 0.0
        %2304 = vmatpush2.msra.mxu0 0.0
        %2305 = vmatprep.subr.mxu0 0.0
        %2306 = vmatpush2.msra.mxu0 0.0
        %2307 = vmatprep.subr.mxu0 0.0
        %2308 = vmatpush2.msra.mxu0 0.0
        %2309 = vmatprep.subr.mxu0 0.0
        %2310 = vmatpush2.msra.mxu0 0.0
        %2311 = vmatprep.mubr.f32.mxu0 0.0
        %v2312 = vand.u32 %v1341, 4294901760
        %2313 = vmatmul.mubr.f32.gmra.mxu0 %v2312
        %v2314 = vpop.f32.mrf.mxu0
        %v2315 = vadd.f32 %v2237, %v2314
        %v2316 = vpop.f32.mrf.mxu0
        %2317 = vmatprep.mubr.f32.mxu0 0.0
        %v2318 = vand.u32 %v1344, 4294901760
        %2319 = vmatmul.mubr.f32.gmra.mxu0 %v2318
        %v2320 = vpop.f32.mrf.mxu0
        %v2321 = vadd.f32 %v2243, %v2320
        %v2322 = vpop.f32.mrf.mxu0
        %2323 = vdwg.mxu0
        %2326 = vrot.lane.b32.xlu0 %v1826, 64
        %v2327 = vpop.permute.xlu0 %2326
        %2328 = vrot.lane.b32.xlu0 %v1832, 64
        %v2329 = vpop.permute.xlu0 %2328
        %v2332 = vsel %vm273, %v267, %v2327
        %v2333 = vsel %vm273, %v268, %v2329
        %2334 = vst [vmem:[%s253] sm:$0xff] %v2332
        %2335 = vst.msk [vmem:[%s253 + $0x8] sm:$0xff] %vm273, %v2315
        %2336 = vst [vmem:[%s253 + $0x10] sm:$0xff] %v2333
        %2337 = vst.msk [vmem:[%s253 + $0x18] sm:$0xff] %vm273, %v2321
        %s2338 = sand.u32 %s133, 1
        %s2339 = scalar_lea.sflag [#allocation4], %s2338
        %s2340 = sand.u32 %s133, 1
        %s2341 = smul.addr %s2340, 32
        %s2342 = scalar_lea.vmem [#allocation5], %s2341
        // Predicated region
        $region41: #{tpu_custom_call.1} parent=35 // pred_check
          %p2343 = pneg %p143
        $region42: #{tpu_custom_call.1} parent=35 // pred_check_branch
          %2345 = sbr.rel (%p2343) target = $region44
        $region43: #{tpu_custom_call.1} parent=35 // pred_region
          %s2347 = ssub.s32 512, 512
          %2348 = vsyncadd %s2339, %s2347
          %s2349 = smul.addr %s21, 4
          %s2350 = smul.addr %s2349, 128
          %s2351 = scalar_lea.hbm %s4, %s2350
          %s2352 = sshll.u32 %s2342, 4
          %s2353 = int_to_ptr.vmem [resolvable:$true] %s2352
          %2358 = dma.vmem_to_hbm [thread:$0]  %s2353, 512, %s2351, %s2339, 256, 256, 16
        $region44: #{tpu_custom_call.1} parent=35 // pred_fallthru
          _
      $region36: #{tpu_custom_call.1} parent=5 // pred_fallthru
        _
      %p2359 = scmp.le.s32.totalorder 2, %s16
      // Predicated region
      $region45: #{tpu_custom_call.1} parent=5 // pred_check
        %p2360 = pneg %p2359
      $region46: #{tpu_custom_call.1} parent=5 // pred_check_branch
        %2362 = sbr.rel (%p2360) target = $region48
      $region47: #{tpu_custom_call.1} parent=5 // pred_region
        %s2363 = ssub.s32 %s16, 2
        // Predicated region
        $region49: #{tpu_custom_call.1} parent=47 // pred_check
          %p2364 = pneg %p149
        $region50: #{tpu_custom_call.1} parent=47 // pred_check_branch
          %2366 = sbr.rel (%p2364) target = $region52
        $region51: #{tpu_custom_call.1} parent=47 // pred_region
          %s2367 = sand.u32 %s134, 1
          %s2368 = scalar_lea.sflag [#allocation4], %s2367
          %s2369 = sand.u32 %s134, 1
          %s2370 = smul.addr %s2369, 32
          %s2371 = scalar_lea.vmem [#allocation5], %s2370
          %2372 = dma.done %s2368, 512
        $region52: #{tpu_custom_call.1} parent=47 // pred_fallthru
          _
      $region48: #{tpu_custom_call.1} parent=5 // pred_fallthru
        _
    $region6: #{tpu_custom_call.1} parent=1 // loop_footer
      %s20 = sadd.s32 1, %s16
    $region7: #{tpu_custom_call.1} parent=1 // loop_footer_branch
      %15 = sbr.rel target = $region3
    $region8: #{tpu_custom_call.1} parent=1 // loop_exit
      _
    %2373 = vsyncpa [#allocation3], 1
    %s2374 = scalar_lea.sflag [#allocation3], 1
    %2375 = vsyncpa %s2374, 1
    %2376 = vsyncpa [#allocation4], 1
    %s2377 = scalar_lea.sflag [#allocation4], 1
    %2378 = vsyncpa %s2377, 1

</llo_original>
